<compile_context>
chip_gen: v7x
topology: tpu7x:2x2x1
jax: 0.10.0
libtpu: 0.0.40
codegen_flags: <defaults>
</compile_context>

<pallas_src>
import functools

import jax
import jax.numpy as jnp
from jax.experimental import pallas as pl
from jax.experimental.pallas import tpu as pltpu


def _ce_kernel(p_ref, t_ref, o_ref, acc_loss, acc_cnt, *,
               ignore_index, pack, n_classes):
    """Grid axis 0 walks row blocks sequentially; scratch accumulates."""
    i = pl.program_id(0)
    C = n_classes

    @pl.when(i == 0)
    def _():
        acc_loss[...] = jnp.zeros_like(acc_loss)
        acc_cnt[...] = jnp.zeros_like(acc_cnt)

    p = p_ref[...].astype(jnp.float32)            # (tm_p, pack*C)
    t = t_ref[...]                                # (tm_p, pack) int32
    tm_p = p.shape[0]
    lanes = pack * C

    lane = jax.lax.broadcasted_iota(jnp.int32, (tm_p, lanes), 1)

    if pack == 1:
        # Generic path (any C): one row per sublane-row, classes on lanes.
        match = lane == t                                      # (tm_p, C)
        p_t = jnp.sum(jnp.where(match, p, 0.0), axis=-1, keepdims=True)
        sum_p = jnp.sum(p, axis=-1, keepdims=True)             # (tm_p, 1)
    else:
        # Lane-packed path: `pack` rows share one 128-lane vreg row.
        cls = lane & (C - 1)                       # class id inside a sub-row
        # Broadcast each sub-row's target across its C lanes (short static
        # select chain; review item: cheap packed-layout index derivation).
        t_b = t_ref[:, 0:1]
        for s in range(1, pack):
            t_b = jnp.where(lane >= s * C, t_ref[:, s:s + 1], t_b)
        match = cls == t_b                         # one-hot of the target lane

        # Exact bf16 hi/lo split: hi + lo == p to ~1e-5 relative and both
        # halves are bf16-exact, so the single-pass bf16 MXU matmuls below
        # introduce no further error (weights are exactly 0/1, f32 accumulate).
        hi = p.astype(jnp.bfloat16)
        lo = (p - hi.astype(jnp.float32)).astype(jnp.bfloat16)
        pt_hi = jnp.where(match, hi, jnp.zeros_like(hi))
        pt_lo = jnp.where(match, lo, jnp.zeros_like(lo))

        # 0/1 selector: column s sums the C lanes belonging to sub-row s.
        shift = C.bit_length() - 1                 # log2(C); C is a power of 2
        li = jax.lax.broadcasted_iota(jnp.int32, (lanes, lanes), 0)
        ci = jax.lax.broadcasted_iota(jnp.int32, (lanes, lanes), 1)
        sel = jnp.where((li >> shift) == ci, 1.0, 0.0).astype(jnp.bfloat16)

        def group_sum(a_hi, a_lo):                 # (tm_p, 128) -> (tm_p, pack)
            full = (jnp.dot(a_hi, sel, preferred_element_type=jnp.float32) +
                    jnp.dot(a_lo, sel, preferred_element_type=jnp.float32))
            return full[:, :pack]

        sum_p = group_sum(hi, lo)                  # per-row sum of probabilities
        p_t = group_sum(pt_hi, pt_lo)              # per-row p[target]

    # Rows past the real row count carry ignore_index targets (the wrapper pads
    # the small target vector), so `valid` masks ignored AND tail rows; the
    # where-selects keep NaN/Inf from garbage tail data out of the result.
    valid = t != ignore_index
    safe_sum = jnp.where(valid, sum_p, 1.0)
    safe_pt = jnp.where(valid, p_t, 1.0)
    per_row = jnp.log(safe_sum / safe_pt)          # one EUP log per row

    acc_loss[...] += per_row
    acc_cnt[...] += valid.astype(jnp.float32)

    @pl.when(i == pl.num_programs(0) - 1)
    def _():
        total = jnp.sum(acc_loss[...], keepdims=True)     # (1, 1)
        count = jnp.sum(acc_cnt[...], keepdims=True)      # (1, 1)
        # 'mean' + ignore_index semantics: NaN if every target is ignored.
        o_ref[...] = total / count


def _round_up(x, m):
    return ((x + m - 1) // m) * m


def ce_loss(output, target, *, ignore_index=-1, block_rows=None):
    """output: (N, 249, C) class probabilities; target: (N, T>=249) int ids."""
    N, S, C = output.shape
    assert S == 249, "the module reshapes output against target[:, :249]"
    target = target[:, :249]

    M = N * S
    probs = output.reshape(M, C)                   # zero-cost view (bf16 inputs
    tgt = target.reshape(M).astype(jnp.int32)      # also fine; kernel upcasts)

    # Lane packing: `pack` rows per 128-lane vreg row when it is a zero-cost
    # reshape (C a power of two dividing 128, pack | M).  Otherwise fall back
    # to the generic layout rather than copying the activation through HBM.
    pack = 1
    if 16 <= C <= 64 and (C & (C - 1)) == 0:
        full_pack = 128 // C
        if M % full_pack == 0:
            pack = full_pack
    Mp = M // pack
    probs_p = probs.reshape(Mp, pack * C)          # still a zero-cost view

    if block_rows is None:
        # VMEM per packed row: double-buffered probs + target blocks plus the
        # two single-buffered f32 accumulators, all lane-padded to 128.
        c_pad = _round_up(pack * C, 128)
        bytes_per_prow = 2 * c_pad * 4 + 2 * 128 * 4 + 2 * 128 * 4
        budget = 20 * 1024 * 1024                  # headroom under 32 MiB limit
        cap = max(8, min(4096, (budget // bytes_per_prow) // 8 * 8))
        # Round UP / balance: one grid step for small problems, no near-empty
        # tail block for large ones (review item 4).
        n_blk = pl.cdiv(Mp, cap)
        block_rows = min(cap, _round_up(pl.cdiv(Mp, n_blk), 8))
    tm_p = max(8, _round_up(block_rows, 8))
    n_blk = pl.cdiv(Mp, tm_p)

    # Pad the (tiny) target vector with ignore_index out to the grid extent so
    # the kernel needs no row-index masking and tail blocks contribute zero.
    rows_padded = n_blk * tm_p * pack
    if rows_padded > M:
        tgt = jnp.concatenate(
            [tgt, jnp.full((rows_padded - M,), ignore_index, jnp.int32)])
    tgt_p = tgt.reshape(rows_padded // pack, pack)

    loss = pl.pallas_call(
        functools.partial(_ce_kernel, ignore_index=ignore_index,
                          pack=pack, n_classes=C),
        out_shape=jax.ShapeDtypeStruct((1, 1), jnp.float32),
        grid_spec=pltpu.PrefetchScalarGridSpec(
            num_scalar_prefetch=0,
            grid=(n_blk,),
            in_specs=[
                pl.BlockSpec((tm_p, pack * C), lambda i: (i, 0)),
                pl.BlockSpec((tm_p, pack), lambda i: (i, 0)),
            ],
            out_specs=pl.BlockSpec((1, 1), lambda i: (0, 0)),
            scratch_shapes=[
                pltpu.VMEM((tm_p, pack), jnp.float32),  # per-row loss partials
                pltpu.VMEM((tm_p, pack), jnp.float32),  # per-row valid counts
            ],
        ),
        # TODO(synk): v7x could split rows across its two TensorCores (leading
        # "parallel" axis + per-core partial outputs combined in the wrapper);
        # skipped: the sequential accumulator protocol assumes one core and the
        # module's real row count (N*249) is too small to benefit.
        compiler_params=pltpu.CompilerParams(
            dimension_semantics=("arbitrary",),
            vmem_limit_bytes=32 * 1024 * 1024,
        ),
    )(probs_p, tgt_p)
    return loss[0, 0]


def _reference(output, target, ignore_index=-1):
    """Pure-JAX re-implementation of the PyTorch forward, for checking."""
    target = target[:, :249]
    x = jnp.log(output).reshape(-1, output.shape[-1])
    t = target.reshape(-1).astype(jnp.int32)
    lse = jax.scipy.special.logsumexp(x, axis=-1)
    xt = jnp.take_along_axis(x, jnp.clip(t, 0, None)[:, None], axis=-1)[:, 0]
    valid = t != ignore_index
    per = jnp.where(valid, lse - xt, 0.0)
    return jnp.sum(per) / jnp.sum(valid.astype(jnp.float32))


if __name__ == "__main__":
    key = jax.random.PRNGKey(0)

    def run_case(n, c, case_id):
        k1, k2, k3 = jax.random.split(jax.random.fold_in(key, case_id), 3)
        s, t_len = 249, 256
        # Positive "probabilities" (the module only needs log() to be finite).
        output = jax.random.uniform(k1, (n, s, c), jnp.float32,
                                    minval=0.05, maxval=1.0)
        target = jax.random.randint(k2, (n, t_len), 0, c, dtype=jnp.int32)
        ign = jax.random.uniform(k3, (n, t_len)) < 0.1
        target = jnp.where(ign, -1, target)

        loss = jax.block_until_ready(ce_loss(output, target, ignore_index=-1))
        ref = _reference(output, target, ignore_index=-1)
        assert jnp.allclose(loss, ref, rtol=1e-5, atol=1e-5), (n, c, loss, ref)

    run_case(4, 32, 0)    # lane-packed path (pack = 4, C = 32)
    run_case(2, 48, 1)    # generic fallback path (pack = 1, non-pow2 C)
    print("KERNEL_OK")
</pallas_src>

<mosaic_0001>
module attributes {stable_mosaic.version = 11 : i64} {
  func.func @_ce_kernel(%arg0: i32, %arg1: memref<256x128xf32, #tpu.memory_space<vmem>>, %arg2: memref<256x4xi32, #tpu.memory_space<vmem>>, %arg3: memref<1x1xf32, #tpu.memory_space<vmem>>, %arg4: memref<256x4xf32, #tpu.memory_space<vmem>>, %arg5: memref<256x4xf32, #tpu.memory_space<vmem>>) attributes {dimension_semantics = [#tpu.dimension_semantics<arbitrary>], iteration_bounds = array<i64: 1>, scalar_prefetch = 0 : i64, scratch_operands = 2 : i64, tpu.core_type = #tpu.core_type<tc>, window_params = [{transform_indices = @transform_0, window_bounds = array<i64: 256, 128>}, {transform_indices = @transform_1, window_bounds = array<i64: 256, 4>}, {pipeline_mode = #tpu.pipeline_mode<synchronous>, transform_indices = @transform_2, window_bounds = array<i64: 1, 1>}]} {
    %c0_i32 = arith.constant 0 : i32
    %0 = arith.cmpi eq, %arg0, %c0_i32 : i32
    %1 = arith.extui %0 : i1 to i32
    %c0_i32_0 = arith.constant 0 : i32
    %2 = arith.cmpi ne, %1, %c0_i32_0 : i32
    scf.if %2 {
      %cst_28 = arith.constant 0.000000e+00 : f32
      %74 = vector.broadcast %cst_28 : f32 to vector<256x4xf32>
      %c0_29 = arith.constant 0 : index
      %c0_30 = arith.constant 0 : index
      %75 = vector.load %arg4[%c0_29, %c0_30] : memref<256x4xf32, #tpu.memory_space<vmem>>, vector<256x4xf32>
      tpu.vector_store %arg4[%c0_29, %c0_30], %74 {strides = array<i32>} : memref<256x4xf32, #tpu.memory_space<vmem>>, vector<256x4xf32>,
      %cst_31 = arith.constant 0.000000e+00 : f32
      %76 = vector.broadcast %cst_31 : f32 to vector<256x4xf32>
      %c0_32 = arith.constant 0 : index
      %c0_33 = arith.constant 0 : index
      %77 = vector.load %arg5[%c0_32, %c0_33] : memref<256x4xf32, #tpu.memory_space<vmem>>, vector<256x4xf32>
      tpu.vector_store %arg5[%c0_32, %c0_33], %76 {strides = array<i32>} : memref<256x4xf32, #tpu.memory_space<vmem>>, vector<256x4xf32>,
    } else {
    }
    %c0 = arith.constant 0 : index
    %c0_1 = arith.constant 0 : index
    %3 = vector.load %arg1[%c0, %c0_1] : memref<256x128xf32, #tpu.memory_space<vmem>>, vector<256x128xf32>
    %c0_2 = arith.constant 0 : index
    %c0_3 = arith.constant 0 : index
    %4 = vector.load %arg2[%c0_2, %c0_3] : memref<256x4xi32, #tpu.memory_space<vmem>>, vector<256x4xi32>
    %5 = tpu.iota {dimensions = array<i32: 1>} : vector<256x128xi32>
    %c31_i32 = arith.constant 31 : i32
    %6 = vector.broadcast %c31_i32 : i32 to vector<256x128xi32>
    %7 = arith.andi %5, %6 : vector<256x128xi32>
    %c0_4 = arith.constant 0 : index
    %c0_5 = arith.constant 0 : index
    %8 = vector.load %arg2[%c0_4, %c0_5] : memref<256x4xi32, #tpu.memory_space<vmem>>, vector<256x1xi32>
    %c32_i32 = arith.constant 32 : i32
    %9 = vector.broadcast %c32_i32 : i32 to vector<256x128xi32>
    %10 = arith.cmpi sge, %5, %9 : vector<256x128xi32>
    %c0_6 = arith.constant 0 : index
    %c1 = arith.constant 1 : index
    %11 = vector.load %arg2[%c0_6, %c1] : memref<256x4xi32, #tpu.memory_space<vmem>>, vector<256x1xi32>
    %12 = vector.shape_cast %11 : vector<256x1xi32> to vector<256x1xi32>
    %13 = vector.broadcast %12 : vector<256x1xi32> to vector<256x128xi32>
    %14 = vector.shape_cast %8 : vector<256x1xi32> to vector<256x1xi32>
    %15 = vector.broadcast %14 : vector<256x1xi32> to vector<256x128xi32>
    %16 = arith.select %10, %13, %15 : vector<256x128xi1>, vector<256x128xi32>
    %c64_i32 = arith.constant 64 : i32
    %17 = vector.broadcast %c64_i32 : i32 to vector<256x128xi32>
    %18 = arith.cmpi sge, %5, %17 : vector<256x128xi32>
    %c0_7 = arith.constant 0 : index
    %c2 = arith.constant 2 : index
    %19 = vector.load %arg2[%c0_7, %c2] : memref<256x4xi32, #tpu.memory_space<vmem>>, vector<256x1xi32>
    %20 = vector.shape_cast %19 : vector<256x1xi32> to vector<256x1xi32>
    %21 = vector.broadcast %20 : vector<256x1xi32> to vector<256x128xi32>
    %22 = arith.select %18, %21, %16 : vector<256x128xi1>, vector<256x128xi32>
    %c96_i32 = arith.constant 96 : i32
    %23 = vector.broadcast %c96_i32 : i32 to vector<256x128xi32>
    %24 = arith.cmpi sge, %5, %23 : vector<256x128xi32>
    %c0_8 = arith.constant 0 : index
    %c3 = arith.constant 3 : index
    %25 = vector.load %arg2[%c0_8, %c3] : memref<256x4xi32, #tpu.memory_space<vmem>>, vector<256x1xi32>
    %26 = vector.shape_cast %25 : vector<256x1xi32> to vector<256x1xi32>
    %27 = vector.broadcast %26 : vector<256x1xi32> to vector<256x128xi32>
    %28 = arith.select %24, %27, %22 : vector<256x128xi1>, vector<256x128xi32>
    %29 = arith.cmpi eq, %7, %28 : vector<256x128xi32>
    %30 = arith.truncf %3 : vector<256x128xf32> to vector<256x128xbf16>
    %31 = arith.extf %30 : vector<256x128xbf16> to vector<256x128xf32>
    %32 = arith.subf %3, %31 : vector<256x128xf32>
    %33 = arith.truncf %32 : vector<256x128xf32> to vector<256x128xbf16>
    %cst = arith.constant 0.000000e+00 : bf16
    %34 = vector.broadcast %cst : bf16 to vector<256x128xbf16>
    %35 = arith.select %29, %30, %34 : vector<256x128xi1>, vector<256x128xbf16>
    %cst_9 = arith.constant 0.000000e+00 : bf16
    %36 = vector.broadcast %cst_9 : bf16 to vector<256x128xbf16>
    %37 = arith.select %29, %33, %36 : vector<256x128xi1>, vector<256x128xbf16>
    %38 = tpu.iota {dimensions = array<i32: 0>} : vector<128x128xi32>
    %39 = tpu.iota {dimensions = array<i32: 1>} : vector<128x128xi32>
    %c5_i32 = arith.constant 5 : i32
    %40 = vector.broadcast %c5_i32 : i32 to vector<128x128xi32>
    %41 = arith.shrsi %38, %40 : vector<128x128xi32>
    %42 = arith.cmpi eq, %41, %39 : vector<128x128xi32>
    %cst_10 = arith.constant 1.000000e+00 : f32
    %cst_11 = arith.constant 0.000000e+00 : f32
    %43 = vector.broadcast %cst_10 : f32 to vector<128x128xf32>
    %44 = vector.broadcast %cst_11 : f32 to vector<128x128xf32>
    %45 = arith.select %42, %43, %44 : vector<128x128xi1>, vector<128x128xf32>
    %46 = arith.truncf %45 : vector<128x128xf32> to vector<128x128xbf16>
    %cst_12 = arith.constant dense<0.000000e+00> : vector<256x128xf32>
    %47 = tpu.matmul %30, %46, %cst_12 {dimension_numbers = #tpu.dot_dimension_numbers<[1], [0], [0], [1], [0, 0, 1, 1], [], []>} : vector<256x128xbf16>, vector<128x128xbf16>, vector<256x128xf32> -> vector<256x128xf32>
    %cst_13 = arith.constant dense<0.000000e+00> : vector<256x128xf32>
    %48 = tpu.matmul %33, %46, %cst_13 {dimension_numbers = #tpu.dot_dimension_numbers<[1], [0], [0], [1], [0, 0, 1, 1], [], []>} : vector<256x128xbf16>, vector<128x128xbf16>, vector<256x128xf32> -> vector<256x128xf32>
    %49 = arith.addf %47, %48 : vector<256x128xf32>
    %50 = vector.extract_strided_slice %49 {offsets = [0, 0], sizes = [256, 4], strides = [1, 1]} : vector<256x128xf32> to vector<256x4xf32>
    %cst_14 = arith.constant dense<0.000000e+00> : vector<256x128xf32>
    %51 = tpu.matmul %35, %46, %cst_14 {dimension_numbers = #tpu.dot_dimension_numbers<[1], [0], [0], [1], [0, 0, 1, 1], [], []>} : vector<256x128xbf16>, vector<128x128xbf16>, vector<256x128xf32> -> vector<256x128xf32>
    %cst_15 = arith.constant dense<0.000000e+00> : vector<256x128xf32>
    %52 = tpu.matmul %37, %46, %cst_15 {dimension_numbers = #tpu.dot_dimension_numbers<[1], [0], [0], [1], [0, 0, 1, 1], [], []>} : vector<256x128xbf16>, vector<128x128xbf16>, vector<256x128xf32> -> vector<256x128xf32>
    %53 = arith.addf %51, %52 : vector<256x128xf32>
    %54 = vector.extract_strided_slice %53 {offsets = [0, 0], sizes = [256, 4], strides = [1, 1]} : vector<256x128xf32> to vector<256x4xf32>
    %c-1_i32 = arith.constant -1 : i32
    %55 = vector.broadcast %c-1_i32 : i32 to vector<256x4xi32>
    %56 = arith.cmpi ne, %4, %55 : vector<256x4xi32>
    %cst_16 = arith.constant 1.000000e+00 : f32
    %57 = vector.broadcast %cst_16 : f32 to vector<256x4xf32>
    %58 = arith.select %56, %50, %57 : vector<256x4xi1>, vector<256x4xf32>
    %cst_17 = arith.constant 1.000000e+00 : f32
    %59 = vector.broadcast %cst_17 : f32 to vector<256x4xf32>
    %60 = arith.select %56, %54, %59 : vector<256x4xi1>, vector<256x4xf32>
    %61 = arith.divf %58, %60 : vector<256x4xf32>
    %62 = math.log %61 : vector<256x4xf32>
    %c0_18 = arith.constant 0 : index
    %c0_19 = arith.constant 0 : index
    %63 = vector.load %arg4[%c0_18, %c0_19] : memref<256x4xf32, #tpu.memory_space<vmem>>, vector<256x4xf32>
    %64 = arith.addf %63, %62 : vector<256x4xf32>
    %c0_20 = arith.constant 0 : index
    %c0_21 = arith.constant 0 : index
    %65 = vector.load %arg4[%c0_20, %c0_21] : memref<256x4xf32, #tpu.memory_space<vmem>>, vector<256x4xf32>
    tpu.vector_store %arg4[%c0_20, %c0_21], %64 {strides = array<i32>} : memref<256x4xf32, #tpu.memory_space<vmem>>, vector<256x4xf32>,
    %c0_22 = arith.constant 0 : index
    %c0_23 = arith.constant 0 : index
    %66 = vector.load %arg5[%c0_22, %c0_23] : memref<256x4xf32, #tpu.memory_space<vmem>>, vector<256x4xf32>
    %67 = arith.extui %56 : vector<256x4xi1> to vector<256x4xi32>
    %68 = arith.sitofp %67 : vector<256x4xi32> to vector<256x4xf32>
    %69 = arith.addf %66, %68 : vector<256x4xf32>
    %c0_24 = arith.constant 0 : index
    %c0_25 = arith.constant 0 : index
    %70 = vector.load %arg5[%c0_24, %c0_25] : memref<256x4xf32, #tpu.memory_space<vmem>>, vector<256x4xf32>
    tpu.vector_store %arg5[%c0_24, %c0_25], %69 {strides = array<i32>} : memref<256x4xf32, #tpu.memory_space<vmem>>, vector<256x4xf32>,
    %c0_i32_26 = arith.constant 0 : i32
    %71 = arith.cmpi eq, %arg0, %c0_i32_26 : i32
    %72 = arith.extui %71 : i1 to i32
    %c0_i32_27 = arith.constant 0 : i32
    %73 = arith.cmpi ne, %72, %c0_i32_27 : i32
    scf.if %73 {
      %c0_28 = arith.constant 0 : index
      %c0_29 = arith.constant 0 : index
      %74 = vector.load %arg4[%c0_28, %c0_29] : memref<256x4xf32, #tpu.memory_space<vmem>>, vector<256x4xf32>
      %75 = vector.shape_cast %74 : vector<256x4xf32> to vector<1x256x4xf32>
      %cst_30 = arith.constant dense<0.000000e+00> : vector<1xf32>
      %76 = vector.multi_reduction <add>, %75, %cst_30 [1, 2] : vector<1x256x4xf32> to vector<1xf32>
      %77 = vector.shape_cast %76 : vector<1xf32> to vector<1x1x1xf32>
      %78 = vector.extract %77[0, 0, 0] : f32 from vector<1x1x1xf32>
      %79 = vector.broadcast %78 : f32 to vector<1x1xf32>
      %c0_31 = arith.constant 0 : index
      %c0_32 = arith.constant 0 : index
      %80 = vector.load %arg5[%c0_31, %c0_32] : memref<256x4xf32, #tpu.memory_space<vmem>>, vector<256x4xf32>
      %81 = vector.shape_cast %80 : vector<256x4xf32> to vector<1x256x4xf32>
      %cst_33 = arith.constant dense<0.000000e+00> : vector<1xf32>
      %82 = vector.multi_reduction <add>, %81, %cst_33 [1, 2] : vector<1x256x4xf32> to vector<1xf32>
      %83 = vector.shape_cast %82 : vector<1xf32> to vector<1x1x1xf32>
      %84 = vector.extract %83[0, 0, 0] : f32 from vector<1x1x1xf32>
      %85 = vector.broadcast %84 : f32 to vector<1x1xf32>
      %86 = arith.divf %79, %85 : vector<1x1xf32>
      %c0_34 = arith.constant 0 : index
      %c0_35 = arith.constant 0 : index
      %87 = vector.load %arg3[%c0_34, %c0_35] : memref<1x1xf32, #tpu.memory_space<vmem>>, vector<1x1xf32>
      tpu.vector_store %arg3[%c0_34, %c0_35], %86 {strides = array<i32>} : memref<1x1xf32, #tpu.memory_space<vmem>>, vector<1x1xf32>,
    } else {
    }
    return
  }
  func.func @transform_0(%arg0: i32) -> (i32, i32) {
    %c0_i32 = arith.constant 0 : i32
    %c0_i32_0 = arith.constant 0 : i32
    return %arg0, %c0_i32 : i32, i32
  }
  func.func @transform_1(%arg0: i32) -> (i32, i32) {
    %c0_i32 = arith.constant 0 : i32
    %c0_i32_0 = arith.constant 0 : i32
    return %arg0, %c0_i32 : i32, i32
  }
  func.func @transform_2(%arg0: i32) -> (i32, i32) {
    %c0_i32 = arith.constant 0 : i32
    %c0_i32_0 = arith.constant 0 : i32
    %c0_i32_1 = arith.constant 0 : i32
    return %c0_i32, %c0_i32_0 : i32, i32
  }
}

</mosaic_0001>

<llo_original>
// kernel: tpu_custom_call.1
$region0: #{tpu_custom_call.1}
  #allocation0 [shape = 'u32[]', space=smem, size = 0x4, offset = 0x4, fixed_abs, tag = 'smem constant byte address 0x4 - core index']
  #allocation1 [shape = 'u32[144,128]{1,0:T(1,128)}', space=vmem, size = 0x12000, scoped, tag = 'internal scratch']
  #allocation2 [shape = 'f32[256,4]{1,0:T(8,128)}', space=vmem, size = 0x20000, scoped, tag = 'scratch operand']
  #allocation3 [shape = 'f32[256,4]{1,0:T(8,128)}', space=vmem, size = 0x20000, scoped, tag = 'scratch operand']
  %s0 = inlined_call_operand.vmem [shape: f32[249,128], index: 0, kind: input, shape index: {}]
  %s1 = inlined_call_operand.vmem [shape: s32[256,4], index: 1, kind: input, shape index: {}]
  %s2 = inlined_call_operand.hbm [shape: f32[1,1], index: 2, kind: output, shape index: {}]
  %s3 = sld [smem:[#allocation0]]
  $region26: #{tpu_custom_call.1} parent=0
    _
  %s5 = ssub.s32 1, %s3
  %s6 = scalar_select 0, %s5, %s3
  $region1: #{tpu_custom_call.1} parent=0
    #allocation4 [shape = 'u8[512]{0}', space=vmem, size = 0x400, scoped, tag = 'output window, operand 0, single buffered']
    #allocation5 [shape = 's32[1]{0}', space=sflag, size = 0x4, scoped, tag = 'scoped memory for tpu_custom_call.1']
    %7 = vsyncpa [#allocation5], 0
    // Predicated region
    $region2: #{tpu_custom_call.1} parent=1 // pred_check
      _
    $region3: #{tpu_custom_call.1} parent=1 // pred_check_branch
      %9 = sbr.rel (0) target = $region5
    $region4: #{tpu_custom_call.1} parent=1 // pred_region
      _
    $region5: #{tpu_custom_call.1} parent=1 // pred_fallthru
      _
    // Predicated region
    $region6: #{tpu_custom_call.1} parent=1 // pred_check
      _
    $region7: #{tpu_custom_call.1} parent=1 // pred_check_branch
      %11 = sbr.rel (0) target = $region9
    $region8: #{tpu_custom_call.1} parent=1 // pred_region
      _
    $region9: #{tpu_custom_call.1} parent=1 // pred_fallthru
      _
    %p13 = scmp.eq.s32.totalorder 0, 0
    // Predicated region
    $region10: #{tpu_custom_call.1} parent=1 // pred_check
      %p14 = pneg %p13
    $region11: #{tpu_custom_call.1} parent=1 // pred_check_branch
      %16 = sbr.rel (%p14) target = $region13
    $region12: #{tpu_custom_call.1} parent=1 // pred_region
      %vm17 = vcmask 31744
      %18 = vst.msk [vmem:[#allocation2] sm:$0xff] %vm17, 0.0
      %19 = vst.msk [vmem:[#allocation2 + $0x8] sm:$0xff] %vm17, 0.0
      %20 = vst.msk [vmem:[#allocation2 + $0x10] sm:$0xff] %vm17, 0.0
      %21 = vst.msk [vmem:[#allocation2 + $0x18] sm:$0xff] %vm17, 0.0
      %22 = vst.msk [vmem:[#allocation2 + $0x20] sm:$0xff] %vm17, 0.0
      %23 = vst.msk [vmem:[#allocation2 + $0x28] sm:$0xff] %vm17, 0.0
      %24 = vst.msk [vmem:[#allocation2 + $0x30] sm:$0xff] %vm17, 0.0
      %25 = vst.msk [vmem:[#allocation2 + $0x38] sm:$0xff] %vm17, 0.0
      %26 = vst.msk [vmem:[#allocation2 + $0x40] sm:$0xff] %vm17, 0.0
      %27 = vst.msk [vmem:[#allocation2 + $0x48] sm:$0xff] %vm17, 0.0
      %28 = vst.msk [vmem:[#allocation2 + $0x50] sm:$0xff] %vm17, 0.0
      %29 = vst.msk [vmem:[#allocation2 + $0x58] sm:$0xff] %vm17, 0.0
      %30 = vst.msk [vmem:[#allocation2 + $0x60] sm:$0xff] %vm17, 0.0
      %31 = vst.msk [vmem:[#allocation2 + $0x68] sm:$0xff] %vm17, 0.0
      %32 = vst.msk [vmem:[#allocation2 + $0x70] sm:$0xff] %vm17, 0.0
      %33 = vst.msk [vmem:[#allocation2 + $0x78] sm:$0xff] %vm17, 0.0
      %34 = vst.msk [vmem:[#allocation2 + $0x80] sm:$0xff] %vm17, 0.0
      %35 = vst.msk [vmem:[#allocation2 + $0x88] sm:$0xff] %vm17, 0.0
      %36 = vst.msk [vmem:[#allocation2 + $0x90] sm:$0xff] %vm17, 0.0
      %37 = vst.msk [vmem:[#allocation2 + $0x98] sm:$0xff] %vm17, 0.0
      %38 = vst.msk [vmem:[#allocation2 + $0xa0] sm:$0xff] %vm17, 0.0
      %39 = vst.msk [vmem:[#allocation2 + $0xa8] sm:$0xff] %vm17, 0.0
      %40 = vst.msk [vmem:[#allocation2 + $0xb0] sm:$0xff] %vm17, 0.0
      %41 = vst.msk [vmem:[#allocation2 + $0xb8] sm:$0xff] %vm17, 0.0
      %42 = vst.msk [vmem:[#allocation2 + $0xc0] sm:$0xff] %vm17, 0.0
      %43 = vst.msk [vmem:[#allocation2 + $0xc8] sm:$0xff] %vm17, 0.0
      %44 = vst.msk [vmem:[#allocation2 + $0xd0] sm:$0xff] %vm17, 0.0
      %45 = vst.msk [vmem:[#allocation2 + $0xd8] sm:$0xff] %vm17, 0.0
      %46 = vst.msk [vmem:[#allocation2 + $0xe0] sm:$0xff] %vm17, 0.0
      %47 = vst.msk [vmem:[#allocation2 + $0xe8] sm:$0xff] %vm17, 0.0
      %48 = vst.msk [vmem:[#allocation2 + $0xf0] sm:$0xff] %vm17, 0.0
      %49 = vst.msk [vmem:[#allocation2 + $0xf8] sm:$0xff] %vm17, 0.0
      %50 = vst.msk [vmem:[#allocation3] sm:$0xff] %vm17, 0.0
      %51 = vst.msk [vmem:[#allocation3 + $0x8] sm:$0xff] %vm17, 0.0
      %52 = vst.msk [vmem:[#allocation3 + $0x10] sm:$0xff] %vm17, 0.0
      %53 = vst.msk [vmem:[#allocation3 + $0x18] sm:$0xff] %vm17, 0.0
      %54 = vst.msk [vmem:[#allocation3 + $0x20] sm:$0xff] %vm17, 0.0
      %55 = vst.msk [vmem:[#allocation3 + $0x28] sm:$0xff] %vm17, 0.0
      %56 = vst.msk [vmem:[#allocation3 + $0x30] sm:$0xff] %vm17, 0.0
      %57 = vst.msk [vmem:[#allocation3 + $0x38] sm:$0xff] %vm17, 0.0
      %58 = vst.msk [vmem:[#allocation3 + $0x40] sm:$0xff] %vm17, 0.0
      %59 = vst.msk [vmem:[#allocation3 + $0x48] sm:$0xff] %vm17, 0.0
      %60 = vst.msk [vmem:[#allocation3 + $0x50] sm:$0xff] %vm17, 0.0
      %61 = vst.msk [vmem:[#allocation3 + $0x58] sm:$0xff] %vm17, 0.0
      %62 = vst.msk [vmem:[#allocation3 + $0x60] sm:$0xff] %vm17, 0.0
      %63 = vst.msk [vmem:[#allocation3 + $0x68] sm:$0xff] %vm17, 0.0
      %64 = vst.msk [vmem:[#allocation3 + $0x70] sm:$0xff] %vm17, 0.0
      %65 = vst.msk [vmem:[#allocation3 + $0x78] sm:$0xff] %vm17, 0.0
      %66 = vst.msk [vmem:[#allocation3 + $0x80] sm:$0xff] %vm17, 0.0
      %67 = vst.msk [vmem:[#allocation3 + $0x88] sm:$0xff] %vm17, 0.0
      %68 = vst.msk [vmem:[#allocation3 + $0x90] sm:$0xff] %vm17, 0.0
      %69 = vst.msk [vmem:[#allocation3 + $0x98] sm:$0xff] %vm17, 0.0
      %70 = vst.msk [vmem:[#allocation3 + $0xa0] sm:$0xff] %vm17, 0.0
      %71 = vst.msk [vmem:[#allocation3 + $0xa8] sm:$0xff] %vm17, 0.0
      %72 = vst.msk [vmem:[#allocation3 + $0xb0] sm:$0xff] %vm17, 0.0
      %73 = vst.msk [vmem:[#allocation3 + $0xb8] sm:$0xff] %vm17, 0.0
      %74 = vst.msk [vmem:[#allocation3 + $0xc0] sm:$0xff] %vm17, 0.0
      %75 = vst.msk [vmem:[#allocation3 + $0xc8] sm:$0xff] %vm17, 0.0
      %76 = vst.msk [vmem:[#allocation3 + $0xd0] sm:$0xff] %vm17, 0.0
      %77 = vst.msk [vmem:[#allocation3 + $0xd8] sm:$0xff] %vm17, 0.0
      %78 = vst.msk [vmem:[#allocation3 + $0xe0] sm:$0xff] %vm17, 0.0
      %79 = vst.msk [vmem:[#allocation3 + $0xe8] sm:$0xff] %vm17, 0.0
      %80 = vst.msk [vmem:[#allocation3 + $0xf0] sm:$0xff] %vm17, 0.0
      %81 = vst.msk [vmem:[#allocation3 + $0xf8] sm:$0xff] %vm17, 0.0
    $region13: #{tpu_custom_call.1} parent=1 // pred_fallthru
      _
    %v82 = vld [vmem:[%s0] sm:$0xff]
    %v83 = vld [vmem:[%s0 + $0x8] sm:$0xff]
    %v84 = vld [vmem:[%s0 + $0x10] sm:$0xff]
    %v85 = vld [vmem:[%s0 + $0x18] sm:$0xff]
    %v86 = vld [vmem:[%s0 + $0x20] sm:$0xff]
    %v87 = vld [vmem:[%s0 + $0x28] sm:$0xff]
    %v88 = vld [vmem:[%s0 + $0x30] sm:$0xff]
    %v89 = vld [vmem:[%s0 + $0x38] sm:$0xff]
    %v90 = vld [vmem:[%s0 + $0x40] sm:$0xff]
    %v91 = vld [vmem:[%s0 + $0x48] sm:$0xff]
    %v92 = vld [vmem:[%s0 + $0x50] sm:$0xff]
    %v93 = vld [vmem:[%s0 + $0x58] sm:$0xff]
    %v94 = vld [vmem:[%s0 + $0x60] sm:$0xff]
    %v95 = vld [vmem:[%s0 + $0x68] sm:$0xff]
    %v96 = vld [vmem:[%s0 + $0x70] sm:$0xff]
    %v97 = vld [vmem:[%s0 + $0x78] sm:$0xff]
    %v98 = vld [vmem:[%s0 + $0x80] sm:$0xff]
    %v99 = vld [vmem:[%s0 + $0x88] sm:$0xff]
    %v100 = vld [vmem:[%s0 + $0x90] sm:$0xff]
    %v101 = vld [vmem:[%s0 + $0x98] sm:$0xff]
    %v102 = vld [vmem:[%s0 + $0xa0] sm:$0xff]
    %v103 = vld [vmem:[%s0 + $0xa8] sm:$0xff]
    %v104 = vld [vmem:[%s0 + $0xb0] sm:$0xff]
    %v105 = vld [vmem:[%s0 + $0xb8] sm:$0xff]
    %v106 = vld [vmem:[%s0 + $0xc0] sm:$0xff]
    %v107 = vld [vmem:[%s0 + $0xc8] sm:$0xff]
    %v108 = vld [vmem:[%s0 + $0xd0] sm:$0xff]
    %v109 = vld [vmem:[%s0 + $0xd8] sm:$0xff]
    %v110 = vld [vmem:[%s0 + $0xe0] sm:$0xff]
    %v111 = vld [vmem:[%s0 + $0xe8] sm:$0xff]
    %v112 = vld [vmem:[%s0 + $0xf0] sm:$0xff]
    %v113 = vld [vmem:[%s0 + $0xf8] sm:$0xff]
    %v114 = vld [vmem:[%s1] sm:$0xff]
    %v115 = vld [vmem:[%s1 + $0x8] sm:$0xff]
    %v116 = vld [vmem:[%s1 + $0x10] sm:$0xff]
    %v117 = vld [vmem:[%s1 + $0x18] sm:$0xff]
    %v118 = vld [vmem:[%s1 + $0x20] sm:$0xff]
    %v119 = vld [vmem:[%s1 + $0x28] sm:$0xff]
    %v120 = vld [vmem:[%s1 + $0x30] sm:$0xff]
    %v121 = vld [vmem:[%s1 + $0x38] sm:$0xff]
    %v122 = vld [vmem:[%s1 + $0x40] sm:$0xff]
    %v123 = vld [vmem:[%s1 + $0x48] sm:$0xff]
    %v124 = vld [vmem:[%s1 + $0x50] sm:$0xff]
    %v125 = vld [vmem:[%s1 + $0x58] sm:$0xff]
    %v126 = vld [vmem:[%s1 + $0x60] sm:$0xff]
    %v127 = vld [vmem:[%s1 + $0x68] sm:$0xff]
    %v128 = vld [vmem:[%s1 + $0x70] sm:$0xff]
    %v129 = vld [vmem:[%s1 + $0x78] sm:$0xff]
    %v130 = vld [vmem:[%s1 + $0x80] sm:$0xff]
    %v131 = vld [vmem:[%s1 + $0x88] sm:$0xff]
    %v132 = vld [vmem:[%s1 + $0x90] sm:$0xff]
    %v133 = vld [vmem:[%s1 + $0x98] sm:$0xff]
    %v134 = vld [vmem:[%s1 + $0xa0] sm:$0xff]
    %v135 = vld [vmem:[%s1 + $0xa8] sm:$0xff]
    %v136 = vld [vmem:[%s1 + $0xb0] sm:$0xff]
    %v137 = vld [vmem:[%s1 + $0xb8] sm:$0xff]
    %v138 = vld [vmem:[%s1 + $0xc0] sm:$0xff]
    %v139 = vld [vmem:[%s1 + $0xc8] sm:$0xff]
    %v140 = vld [vmem:[%s1 + $0xd0] sm:$0xff]
    %v141 = vld [vmem:[%s1 + $0xd8] sm:$0xff]
    %v142 = vld [vmem:[%s1 + $0xe0] sm:$0xff]
    %v143 = vld [vmem:[%s1 + $0xe8] sm:$0xff]
    %v144 = vld [vmem:[%s1 + $0xf0] sm:$0xff]
    %v145 = vld [vmem:[%s1 + $0xf8] sm:$0xff]
    %v146 = vlaneseq
    %v147 = vand.u32 %v146, 127
    %v148 = vand.u32 %v147, 31
    %vm149 = vcmp.ge.s32.totalorder %v147, 32
    %150 = vset.pattern.permute.xlu0 1
    %151 = vperm.xlu0 %150, %v114
    %v152 = vpop.permute.xlu0 %151
    %153 = vset.pattern.permute.xlu0 1
    %154 = vperm.xlu0 %153, %v115
    %v155 = vpop.permute.xlu0 %154
    %156 = vset.pattern.permute.xlu0 1
    %157 = vperm.xlu0 %156, %v116
    %v158 = vpop.permute.xlu0 %157
    %159 = vset.pattern.permute.xlu0 1
    %160 = vperm.xlu0 %159, %v117
    %v161 = vpop.permute.xlu0 %160
    %162 = vset.pattern.permute.xlu0 1
    %163 = vperm.xlu0 %162, %v118
    %v164 = vpop.permute.xlu0 %163
    %165 = vset.pattern.permute.xlu0 1
    %166 = vperm.xlu0 %165, %v119
    %v167 = vpop.permute.xlu0 %166
    %168 = vset.pattern.permute.xlu0 1
    %169 = vperm.xlu0 %168, %v120
    %v170 = vpop.permute.xlu0 %169
    %171 = vset.pattern.permute.xlu0 1
    %172 = vperm.xlu0 %171, %v121
    %v173 = vpop.permute.xlu0 %172
    %174 = vset.pattern.permute.xlu0 1
    %175 = vperm.xlu0 %174, %v122
    %v176 = vpop.permute.xlu0 %175
    %177 = vset.pattern.permute.xlu0 1
    %178 = vperm.xlu0 %177, %v123
    %v179 = vpop.permute.xlu0 %178
    %180 = vset.pattern.permute.xlu0 1
    %181 = vperm.xlu0 %180, %v124
    %v182 = vpop.permute.xlu0 %181
    %183 = vset.pattern.permute.xlu0 1
    %184 = vperm.xlu0 %183, %v125
    %v185 = vpop.permute.xlu0 %184
    %186 = vset.pattern.permute.xlu0 1
    %187 = vperm.xlu0 %186, %v126
    %v188 = vpop.permute.xlu0 %187
    %189 = vset.pattern.permute.xlu0 1
    %190 = vperm.xlu0 %189, %v127
    %v191 = vpop.permute.xlu0 %190
    %192 = vset.pattern.permute.xlu0 1
    %193 = vperm.xlu0 %192, %v128
    %v194 = vpop.permute.xlu0 %193
    %195 = vset.pattern.permute.xlu0 1
    %196 = vperm.xlu0 %195, %v129
    %v197 = vpop.permute.xlu0 %196
    %198 = vset.pattern.permute.xlu0 1
    %199 = vperm.xlu0 %198, %v130
    %v200 = vpop.permute.xlu0 %199
    %201 = vset.pattern.permute.xlu0 1
    %202 = vperm.xlu0 %201, %v131
    %v203 = vpop.permute.xlu0 %202
    %204 = vset.pattern.permute.xlu0 1
    %205 = vperm.xlu0 %204, %v132
    %v206 = vpop.permute.xlu0 %205
    %207 = vset.pattern.permute.xlu0 1
    %208 = vperm.xlu0 %207, %v133
    %v209 = vpop.permute.xlu0 %208
    %210 = vset.pattern.permute.xlu0 1
    %211 = vperm.xlu0 %210, %v134
    %v212 = vpop.permute.xlu0 %211
    %213 = vset.pattern.permute.xlu0 1
    %214 = vperm.xlu0 %213, %v135
    %v215 = vpop.permute.xlu0 %214
    %216 = vset.pattern.permute.xlu0 1
    %217 = vperm.xlu0 %216, %v136
    %v218 = vpop.permute.xlu0 %217
    %219 = vset.pattern.permute.xlu0 1
    %220 = vperm.xlu0 %219, %v137
    %v221 = vpop.permute.xlu0 %220
    %222 = vset.pattern.permute.xlu0 1
    %223 = vperm.xlu0 %222, %v138
    %v224 = vpop.permute.xlu0 %223
    %225 = vset.pattern.permute.xlu0 1
    %226 = vperm.xlu0 %225, %v139
    %v227 = vpop.permute.xlu0 %226
    %228 = vset.pattern.permute.xlu0 1
    %229 = vperm.xlu0 %228, %v140
    %v230 = vpop.permute.xlu0 %229
    %231 = vset.pattern.permute.xlu0 1
    %232 = vperm.xlu0 %231, %v141
    %v233 = vpop.permute.xlu0 %232
    %234 = vset.pattern.permute.xlu0 1
    %235 = vperm.xlu0 %234, %v142
    %v236 = vpop.permute.xlu0 %235
    %237 = vset.pattern.permute.xlu0 1
    %238 = vperm.xlu0 %237, %v143
    %v239 = vpop.permute.xlu0 %238
    %240 = vset.pattern.permute.xlu0 1
    %241 = vperm.xlu0 %240, %v144
    %v242 = vpop.permute.xlu0 %241
    %243 = vset.pattern.permute.xlu0 1
    %244 = vperm.xlu0 %243, %v145
    %v245 = vpop.permute.xlu0 %244
    %246 = vset.pattern.permute.xlu0 0
    %247 = vperm.xlu0 %246, %v114
    %v248 = vpop.permute.xlu0 %247
    %249 = vset.pattern.permute.xlu0 0
    %250 = vperm.xlu0 %249, %v115
    %v251 = vpop.permute.xlu0 %250
    %252 = vset.pattern.permute.xlu0 0
    %253 = vperm.xlu0 %252, %v116
    %v254 = vpop.permute.xlu0 %253
    %255 = vset.pattern.permute.xlu0 0
    %256 = vperm.xlu0 %255, %v117
    %v257 = vpop.permute.xlu0 %256
    %258 = vset.pattern.permute.xlu0 0
    %259 = vperm.xlu0 %258, %v118
    %v260 = vpop.permute.xlu0 %259
    %261 = vset.pattern.permute.xlu0 0
    %262 = vperm.xlu0 %261, %v119
    %v263 = vpop.permute.xlu0 %262
    %264 = vset.pattern.permute.xlu0 0
    %265 = vperm.xlu0 %264, %v120
    %v266 = vpop.permute.xlu0 %265
    %267 = vset.pattern.permute.xlu0 0
    %268 = vperm.xlu0 %267, %v121
    %v269 = vpop.permute.xlu0 %268
    %270 = vset.pattern.permute.xlu0 0
    %271 = vperm.xlu0 %270, %v122
    %v272 = vpop.permute.xlu0 %271
    %273 = vset.pattern.permute.xlu0 0
    %274 = vperm.xlu0 %273, %v123
    %v275 = vpop.permute.xlu0 %274
    %276 = vset.pattern.permute.xlu0 0
    %277 = vperm.xlu0 %276, %v124
    %v278 = vpop.permute.xlu0 %277
    %279 = vset.pattern.permute.xlu0 0
    %280 = vperm.xlu0 %279, %v125
    %v281 = vpop.permute.xlu0 %280
    %282 = vset.pattern.permute.xlu0 0
    %283 = vperm.xlu0 %282, %v126
    %v284 = vpop.permute.xlu0 %283
    %285 = vset.pattern.permute.xlu0 0
    %286 = vperm.xlu0 %285, %v127
    %v287 = vpop.permute.xlu0 %286
    %288 = vset.pattern.permute.xlu0 0
    %289 = vperm.xlu0 %288, %v128
    %v290 = vpop.permute.xlu0 %289
    %291 = vset.pattern.permute.xlu0 0
    %292 = vperm.xlu0 %291, %v129
    %v293 = vpop.permute.xlu0 %292
    %294 = vset.pattern.permute.xlu0 0
    %295 = vperm.xlu0 %294, %v130
    %v296 = vpop.permute.xlu0 %295
    %297 = vset.pattern.permute.xlu0 0
    %298 = vperm.xlu0 %297, %v131
    %v299 = vpop.permute.xlu0 %298
    %300 = vset.pattern.permute.xlu0 0
    %301 = vperm.xlu0 %300, %v132
    %v302 = vpop.permute.xlu0 %301
    %303 = vset.pattern.permute.xlu0 0
    %304 = vperm.xlu0 %303, %v133
    %v305 = vpop.permute.xlu0 %304
    %306 = vset.pattern.permute.xlu0 0
    %307 = vperm.xlu0 %306, %v134
    %v308 = vpop.permute.xlu0 %307
    %309 = vset.pattern.permute.xlu0 0
    %310 = vperm.xlu0 %309, %v135
    %v311 = vpop.permute.xlu0 %310
    %312 = vset.pattern.permute.xlu0 0
    %313 = vperm.xlu0 %312, %v136
    %v314 = vpop.permute.xlu0 %313
    %315 = vset.pattern.permute.xlu0 0
    %316 = vperm.xlu0 %315, %v137
    %v317 = vpop.permute.xlu0 %316
    %318 = vset.pattern.permute.xlu0 0
    %319 = vperm.xlu0 %318, %v138
    %v320 = vpop.permute.xlu0 %319
    %321 = vset.pattern.permute.xlu0 0
    %322 = vperm.xlu0 %321, %v139
    %v323 = vpop.permute.xlu0 %322
    %324 = vset.pattern.permute.xlu0 0
    %325 = vperm.xlu0 %324, %v140
    %v326 = vpop.permute.xlu0 %325
    %327 = vset.pattern.permute.xlu0 0
    %328 = vperm.xlu0 %327, %v141
    %v329 = vpop.permute.xlu0 %328
    %330 = vset.pattern.permute.xlu0 0
    %331 = vperm.xlu0 %330, %v142
    %v332 = vpop.permute.xlu0 %331
    %333 = vset.pattern.permute.xlu0 0
    %334 = vperm.xlu0 %333, %v143
    %v335 = vpop.permute.xlu0 %334
    %336 = vset.pattern.permute.xlu0 0
    %337 = vperm.xlu0 %336, %v144
    %v338 = vpop.permute.xlu0 %337
    %339 = vset.pattern.permute.xlu0 0
    %340 = vperm.xlu0 %339, %v145
    %v341 = vpop.permute.xlu0 %340
    %v342 = vsel %vm149, %v152, %v248
    %v343 = vsel %vm149, %v155, %v251
    %v344 = vsel %vm149, %v158, %v254
    %v345 = vsel %vm149, %v161, %v257
    %v346 = vsel %vm149, %v164, %v260
    %v347 = vsel %vm149, %v167, %v263
    %v348 = vsel %vm149, %v170, %v266
    %v349 = vsel %vm149, %v173, %v269
    %v350 = vsel %vm149, %v176, %v272
    %v351 = vsel %vm149, %v179, %v275
    %v352 = vsel %vm149, %v182, %v278
    %v353 = vsel %vm149, %v185, %v281
    %v354 = vsel %vm149, %v188, %v284
    %v355 = vsel %vm149, %v191, %v287
    %v356 = vsel %vm149, %v194, %v290
    %v357 = vsel %vm149, %v197, %v293
    %v358 = vsel %vm149, %v200, %v296
    %v359 = vsel %vm149, %v203, %v299
    %v360 = vsel %vm149, %v206, %v302
    %v361 = vsel %vm149, %v209, %v305
    %v362 = vsel %vm149, %v212, %v308
    %v363 = vsel %vm149, %v215, %v311
    %v364 = vsel %vm149, %v218, %v314
    %v365 = vsel %vm149, %v221, %v317
    %v366 = vsel %vm149, %v224, %v320
    %v367 = vsel %vm149, %v227, %v323
    %v368 = vsel %vm149, %v230, %v326
    %v369 = vsel %vm149, %v233, %v329
    %v370 = vsel %vm149, %v236, %v332
    %v371 = vsel %vm149, %v239, %v335
    %v372 = vsel %vm149, %v242, %v338
    %v373 = vsel %vm149, %v245, %v341
    %vm374 = vcmp.ge.s32.totalorder %v147, 64
    %375 = vset.pattern.permute.xlu0 2
    %376 = vperm.xlu0 %375, %v114
    %v377 = vpop.permute.xlu0 %376
    %378 = vset.pattern.permute.xlu0 2
    %379 = vperm.xlu0 %378, %v115
    %v380 = vpop.permute.xlu0 %379
    %381 = vset.pattern.permute.xlu0 2
    %382 = vperm.xlu0 %381, %v116
    %v383 = vpop.permute.xlu0 %382
    %384 = vset.pattern.permute.xlu0 2
    %385 = vperm.xlu0 %384, %v117
    %v386 = vpop.permute.xlu0 %385
    %387 = vset.pattern.permute.xlu0 2
    %388 = vperm.xlu0 %387, %v118
    %v389 = vpop.permute.xlu0 %388
    %390 = vset.pattern.permute.xlu0 2
    %391 = vperm.xlu0 %390, %v119
    %v392 = vpop.permute.xlu0 %391
    %393 = vset.pattern.permute.xlu0 2
    %394 = vperm.xlu0 %393, %v120
    %v395 = vpop.permute.xlu0 %394
    %396 = vset.pattern.permute.xlu0 2
    %397 = vperm.xlu0 %396, %v121
    %v398 = vpop.permute.xlu0 %397
    %399 = vset.pattern.permute.xlu0 2
    %400 = vperm.xlu0 %399, %v122
    %v401 = vpop.permute.xlu0 %400
    %402 = vset.pattern.permute.xlu0 2
    %403 = vperm.xlu0 %402, %v123
    %v404 = vpop.permute.xlu0 %403
    %405 = vset.pattern.permute.xlu0 2
    %406 = vperm.xlu0 %405, %v124
    %v407 = vpop.permute.xlu0 %406
    %408 = vset.pattern.permute.xlu0 2
    %409 = vperm.xlu0 %408, %v125
    %v410 = vpop.permute.xlu0 %409
    %411 = vset.pattern.permute.xlu0 2
    %412 = vperm.xlu0 %411, %v126
    %v413 = vpop.permute.xlu0 %412
    %414 = vset.pattern.permute.xlu0 2
    %415 = vperm.xlu0 %414, %v127
    %v416 = vpop.permute.xlu0 %415
    %417 = vset.pattern.permute.xlu0 2
    %418 = vperm.xlu0 %417, %v128
    %v419 = vpop.permute.xlu0 %418
    %420 = vset.pattern.permute.xlu0 2
    %421 = vperm.xlu0 %420, %v129
    %v422 = vpop.permute.xlu0 %421
    %423 = vset.pattern.permute.xlu0 2
    %424 = vperm.xlu0 %423, %v130
    %v425 = vpop.permute.xlu0 %424
    %426 = vset.pattern.permute.xlu0 2
    %427 = vperm.xlu0 %426, %v131
    %v428 = vpop.permute.xlu0 %427
    %429 = vset.pattern.permute.xlu0 2
    %430 = vperm.xlu0 %429, %v132
    %v431 = vpop.permute.xlu0 %430
    %432 = vset.pattern.permute.xlu0 2
    %433 = vperm.xlu0 %432, %v133
    %v434 = vpop.permute.xlu0 %433
    %435 = vset.pattern.permute.xlu0 2
    %436 = vperm.xlu0 %435, %v134
    %v437 = vpop.permute.xlu0 %436
    %438 = vset.pattern.permute.xlu0 2
    %439 = vperm.xlu0 %438, %v135
    %v440 = vpop.permute.xlu0 %439
    %441 = vset.pattern.permute.xlu0 2
    %442 = vperm.xlu0 %441, %v136
    %v443 = vpop.permute.xlu0 %442
    %444 = vset.pattern.permute.xlu0 2
    %445 = vperm.xlu0 %444, %v137
    %v446 = vpop.permute.xlu0 %445
    %447 = vset.pattern.permute.xlu0 2
    %448 = vperm.xlu0 %447, %v138
    %v449 = vpop.permute.xlu0 %448
    %450 = vset.pattern.permute.xlu0 2
    %451 = vperm.xlu0 %450, %v139
    %v452 = vpop.permute.xlu0 %451
    %453 = vset.pattern.permute.xlu0 2
    %454 = vperm.xlu0 %453, %v140
    %v455 = vpop.permute.xlu0 %454
    %456 = vset.pattern.permute.xlu0 2
    %457 = vperm.xlu0 %456, %v141
    %v458 = vpop.permute.xlu0 %457
    %459 = vset.pattern.permute.xlu0 2
    %460 = vperm.xlu0 %459, %v142
    %v461 = vpop.permute.xlu0 %460
    %462 = vset.pattern.permute.xlu0 2
    %463 = vperm.xlu0 %462, %v143
    %v464 = vpop.permute.xlu0 %463
    %465 = vset.pattern.permute.xlu0 2
    %466 = vperm.xlu0 %465, %v144
    %v467 = vpop.permute.xlu0 %466
    %468 = vset.pattern.permute.xlu0 2
    %469 = vperm.xlu0 %468, %v145
    %v470 = vpop.permute.xlu0 %469
    %v471 = vsel %vm374, %v377, %v342
    %v472 = vsel %vm374, %v380, %v343
    %v473 = vsel %vm374, %v383, %v344
    %v474 = vsel %vm374, %v386, %v345
    %v475 = vsel %vm374, %v389, %v346
    %v476 = vsel %vm374, %v392, %v347
    %v477 = vsel %vm374, %v395, %v348
    %v478 = vsel %vm374, %v398, %v349
    %v479 = vsel %vm374, %v401, %v350
    %v480 = vsel %vm374, %v404, %v351
    %v481 = vsel %vm374, %v407, %v352
    %v482 = vsel %vm374, %v410, %v353
    %v483 = vsel %vm374, %v413, %v354
    %v484 = vsel %vm374, %v416, %v355
    %v485 = vsel %vm374, %v419, %v356
    %v486 = vsel %vm374, %v422, %v357
    %v487 = vsel %vm374, %v425, %v358
    %v488 = vsel %vm374, %v428, %v359
    %v489 = vsel %vm374, %v431, %v360
    %v490 = vsel %vm374, %v434, %v361
    %v491 = vsel %vm374, %v437, %v362
    %v492 = vsel %vm374, %v440, %v363
    %v493 = vsel %vm374, %v443, %v364
    %v494 = vsel %vm374, %v446, %v365
    %v495 = vsel %vm374, %v449, %v366
    %v496 = vsel %vm374, %v452, %v367
    %v497 = vsel %vm374, %v455, %v368
    %v498 = vsel %vm374, %v458, %v369
    %v499 = vsel %vm374, %v461, %v370
    %v500 = vsel %vm374, %v464, %v371
    %v501 = vsel %vm374, %v467, %v372
    %v502 = vsel %vm374, %v470, %v373
    %vm503 = vcmp.ge.s32.totalorder %v147, 96
    %504 = vset.pattern.permute.xlu0 3
    %505 = vperm.xlu0 %504, %v114
    %v506 = vpop.permute.xlu0 %505
    %507 = vset.pattern.permute.xlu0 3
    %508 = vperm.xlu0 %507, %v115
    %v509 = vpop.permute.xlu0 %508
    %510 = vset.pattern.permute.xlu0 3
    %511 = vperm.xlu0 %510, %v116
    %v512 = vpop.permute.xlu0 %511
    %513 = vset.pattern.permute.xlu0 3
    %514 = vperm.xlu0 %513, %v117
    %v515 = vpop.permute.xlu0 %514
    %516 = vset.pattern.permute.xlu0 3
    %517 = vperm.xlu0 %516, %v118
    %v518 = vpop.permute.xlu0 %517
    %519 = vset.pattern.permute.xlu0 3
    %520 = vperm.xlu0 %519, %v119
    %v521 = vpop.permute.xlu0 %520
    %522 = vset.pattern.permute.xlu0 3
    %523 = vperm.xlu0 %522, %v120
    %v524 = vpop.permute.xlu0 %523
    %525 = vset.pattern.permute.xlu0 3
    %526 = vperm.xlu0 %525, %v121
    %v527 = vpop.permute.xlu0 %526
    %528 = vset.pattern.permute.xlu0 3
    %529 = vperm.xlu0 %528, %v122
    %v530 = vpop.permute.xlu0 %529
    %531 = vset.pattern.permute.xlu0 3
    %532 = vperm.xlu0 %531, %v123
    %v533 = vpop.permute.xlu0 %532
    %534 = vset.pattern.permute.xlu0 3
    %535 = vperm.xlu0 %534, %v124
    %v536 = vpop.permute.xlu0 %535
    %537 = vset.pattern.permute.xlu0 3
    %538 = vperm.xlu0 %537, %v125
    %v539 = vpop.permute.xlu0 %538
    %540 = vset.pattern.permute.xlu0 3
    %541 = vperm.xlu0 %540, %v126
    %v542 = vpop.permute.xlu0 %541
    %543 = vset.pattern.permute.xlu0 3
    %544 = vperm.xlu0 %543, %v127
    %v545 = vpop.permute.xlu0 %544
    %546 = vset.pattern.permute.xlu0 3
    %547 = vperm.xlu0 %546, %v128
    %v548 = vpop.permute.xlu0 %547
    %549 = vset.pattern.permute.xlu0 3
    %550 = vperm.xlu0 %549, %v129
    %v551 = vpop.permute.xlu0 %550
    %552 = vset.pattern.permute.xlu0 3
    %553 = vperm.xlu0 %552, %v130
    %v554 = vpop.permute.xlu0 %553
    %555 = vset.pattern.permute.xlu0 3
    %556 = vperm.xlu0 %555, %v131
    %v557 = vpop.permute.xlu0 %556
    %558 = vset.pattern.permute.xlu0 3
    %559 = vperm.xlu0 %558, %v132
    %v560 = vpop.permute.xlu0 %559
    %561 = vset.pattern.permute.xlu0 3
    %562 = vperm.xlu0 %561, %v133
    %v563 = vpop.permute.xlu0 %562
    %564 = vset.pattern.permute.xlu0 3
    %565 = vperm.xlu0 %564, %v134
    %v566 = vpop.permute.xlu0 %565
    %567 = vset.pattern.permute.xlu0 3
    %568 = vperm.xlu0 %567, %v135
    %v569 = vpop.permute.xlu0 %568
    %570 = vset.pattern.permute.xlu0 3
    %571 = vperm.xlu0 %570, %v136
    %v572 = vpop.permute.xlu0 %571
    %573 = vset.pattern.permute.xlu0 3
    %574 = vperm.xlu0 %573, %v137
    %v575 = vpop.permute.xlu0 %574
    %576 = vset.pattern.permute.xlu0 3
    %577 = vperm.xlu0 %576, %v138
    %v578 = vpop.permute.xlu0 %577
    %579 = vset.pattern.permute.xlu0 3
    %580 = vperm.xlu0 %579, %v139
    %v581 = vpop.permute.xlu0 %580
    %582 = vset.pattern.permute.xlu0 3
    %583 = vperm.xlu0 %582, %v140
    %v584 = vpop.permute.xlu0 %583
    %585 = vset.pattern.permute.xlu0 3
    %586 = vperm.xlu0 %585, %v141
    %v587 = vpop.permute.xlu0 %586
    %588 = vset.pattern.permute.xlu0 3
    %589 = vperm.xlu0 %588, %v142
    %v590 = vpop.permute.xlu0 %589
    %591 = vset.pattern.permute.xlu0 3
    %592 = vperm.xlu0 %591, %v143
    %v593 = vpop.permute.xlu0 %592
    %594 = vset.pattern.permute.xlu0 3
    %595 = vperm.xlu0 %594, %v144
    %v596 = vpop.permute.xlu0 %595
    %597 = vset.pattern.permute.xlu0 3
    %598 = vperm.xlu0 %597, %v145
    %v599 = vpop.permute.xlu0 %598
    %v600 = vsel %vm503, %v506, %v471
    %v601 = vsel %vm503, %v509, %v472
    %v602 = vsel %vm503, %v512, %v473
    %v603 = vsel %vm503, %v515, %v474
    %v604 = vsel %vm503, %v518, %v475
    %v605 = vsel %vm503, %v521, %v476
    %v606 = vsel %vm503, %v524, %v477
    %v607 = vsel %vm503, %v527, %v478
    %v608 = vsel %vm503, %v530, %v479
    %v609 = vsel %vm503, %v533, %v480
    %v610 = vsel %vm503, %v536, %v481
    %v611 = vsel %vm503, %v539, %v482
    %v612 = vsel %vm503, %v542, %v483
    %v613 = vsel %vm503, %v545, %v484
    %v614 = vsel %vm503, %v548, %v485
    %v615 = vsel %vm503, %v551, %v486
    %v616 = vsel %vm503, %v554, %v487
    %v617 = vsel %vm503, %v557, %v488
    %v618 = vsel %vm503, %v560, %v489
    %v619 = vsel %vm503, %v563, %v490
    %v620 = vsel %vm503, %v566, %v491
    %v621 = vsel %vm503, %v569, %v492
    %v622 = vsel %vm503, %v572, %v493
    %v623 = vsel %vm503, %v575, %v494
    %v624 = vsel %vm503, %v578, %v495
    %v625 = vsel %vm503, %v581, %v496
    %v626 = vsel %vm503, %v584, %v497
    %v627 = vsel %vm503, %v587, %v498
    %v628 = vsel %vm503, %v590, %v499
    %v629 = vsel %vm503, %v593, %v500
    %v630 = vsel %vm503, %v596, %v501
    %v631 = vsel %vm503, %v599, %v502
    %vm632 = vcmp.eq.s32.totalorder %v148, %v600
    %vm633 = vcmp.eq.s32.totalorder %v148, %v601
    %vm634 = vcmp.eq.s32.totalorder %v148, %v602
    %vm635 = vcmp.eq.s32.totalorder %v148, %v603
    %vm636 = vcmp.eq.s32.totalorder %v148, %v604
    %vm637 = vcmp.eq.s32.totalorder %v148, %v605
    %vm638 = vcmp.eq.s32.totalorder %v148, %v606
    %vm639 = vcmp.eq.s32.totalorder %v148, %v607
    %vm640 = vcmp.eq.s32.totalorder %v148, %v608
    %vm641 = vcmp.eq.s32.totalorder %v148, %v609
    %vm642 = vcmp.eq.s32.totalorder %v148, %v610
    %vm643 = vcmp.eq.s32.totalorder %v148, %v611
    %vm644 = vcmp.eq.s32.totalorder %v148, %v612
    %vm645 = vcmp.eq.s32.totalorder %v148, %v613
    %vm646 = vcmp.eq.s32.totalorder %v148, %v614
    %vm647 = vcmp.eq.s32.totalorder %v148, %v615
    %vm648 = vcmp.eq.s32.totalorder %v148, %v616
    %vm649 = vcmp.eq.s32.totalorder %v148, %v617
    %vm650 = vcmp.eq.s32.totalorder %v148, %v618
    %vm651 = vcmp.eq.s32.totalorder %v148, %v619
    %vm652 = vcmp.eq.s32.totalorder %v148, %v620
    %vm653 = vcmp.eq.s32.totalorder %v148, %v621
    %vm654 = vcmp.eq.s32.totalorder %v148, %v622
    %vm655 = vcmp.eq.s32.totalorder %v148, %v623
    %vm656 = vcmp.eq.s32.totalorder %v148, %v624
    %vm657 = vcmp.eq.s32.totalorder %v148, %v625
    %vm658 = vcmp.eq.s32.totalorder %v148, %v626
    %vm659 = vcmp.eq.s32.totalorder %v148, %v627
    %vm660 = vcmp.eq.s32.totalorder %v148, %v628
    %vm661 = vcmp.eq.s32.totalorder %v148, %v629
    %vm662 = vcmp.eq.s32.totalorder %v148, %v630
    %vm663 = vcmp.eq.s32.totalorder %v148, %v631
    %v664 = vpack.c.bf16 %v83, %v82
    %v665 = vpack.c.bf16 %v85, %v84
    %v666 = vpack.c.bf16 %v87, %v86
    %v667 = vpack.c.bf16 %v89, %v88
    %v668 = vpack.c.bf16 %v91, %v90
    %v669 = vpack.c.bf16 %v93, %v92
    %v670 = vpack.c.bf16 %v95, %v94
    %v671 = vpack.c.bf16 %v97, %v96
    %v672 = vpack.c.bf16 %v99, %v98
    %v673 = vpack.c.bf16 %v101, %v100
    %v674 = vpack.c.bf16 %v103, %v102
    %v675 = vpack.c.bf16 %v105, %v104
    %v676 = vpack.c.bf16 %v107, %v106
    %v677 = vpack.c.bf16 %v109, %v108
    %v678 = vpack.c.bf16 %v111, %v110
    %v679 = vpack.c.bf16 %v113, %v112
    %v680 = vunpack.c.l.bf16 %v664
    %v681 = vunpack.c.h.bf16 %v664
    %v682 = vunpack.c.l.bf16 %v665
    %v683 = vunpack.c.h.bf16 %v665
    %v684 = vunpack.c.l.bf16 %v666
    %v685 = vunpack.c.h.bf16 %v666
    %v686 = vunpack.c.l.bf16 %v667
    %v687 = vunpack.c.h.bf16 %v667
    %v688 = vunpack.c.l.bf16 %v668
    %v689 = vunpack.c.h.bf16 %v668
    %v690 = vunpack.c.l.bf16 %v669
    %v691 = vunpack.c.h.bf16 %v669
    %v692 = vunpack.c.l.bf16 %v670
    %v693 = vunpack.c.h.bf16 %v670
    %v694 = vunpack.c.l.bf16 %v671
    %v695 = vunpack.c.h.bf16 %v671
    %v696 = vunpack.c.l.bf16 %v672
    %v697 = vunpack.c.h.bf16 %v672
    %v698 = vunpack.c.l.bf16 %v673
    %v699 = vunpack.c.h.bf16 %v673
    %v700 = vunpack.c.l.bf16 %v674
    %v701 = vunpack.c.h.bf16 %v674
    %v702 = vunpack.c.l.bf16 %v675
    %v703 = vunpack.c.h.bf16 %v675
    %v704 = vunpack.c.l.bf16 %v676
    %v705 = vunpack.c.h.bf16 %v676
    %v706 = vunpack.c.l.bf16 %v677
    %v707 = vunpack.c.h.bf16 %v677
    %v708 = vunpack.c.l.bf16 %v678
    %v709 = vunpack.c.h.bf16 %v678
    %v710 = vunpack.c.l.bf16 %v679
    %v711 = vunpack.c.h.bf16 %v679
    %v712 = vsub.f32 %v82, %v680
    %v713 = vsub.f32 %v83, %v681
    %v714 = vsub.f32 %v84, %v682
    %v715 = vsub.f32 %v85, %v683
    %v716 = vsub.f32 %v86, %v684
    %v717 = vsub.f32 %v87, %v685
    %v718 = vsub.f32 %v88, %v686
    %v719 = vsub.f32 %v89, %v687
    %v720 = vsub.f32 %v90, %v688
    %v721 = vsub.f32 %v91, %v689
    %v722 = vsub.f32 %v92, %v690
    %v723 = vsub.f32 %v93, %v691
    %v724 = vsub.f32 %v94, %v692
    %v725 = vsub.f32 %v95, %v693
    %v726 = vsub.f32 %v96, %v694
    %v727 = vsub.f32 %v97, %v695
    %v728 = vsub.f32 %v98, %v696
    %v729 = vsub.f32 %v99, %v697
    %v730 = vsub.f32 %v100, %v698
    %v731 = vsub.f32 %v101, %v699
    %v732 = vsub.f32 %v102, %v700
    %v733 = vsub.f32 %v103, %v701
    %v734 = vsub.f32 %v104, %v702
    %v735 = vsub.f32 %v105, %v703
    %v736 = vsub.f32 %v106, %v704
    %v737 = vsub.f32 %v107, %v705
    %v738 = vsub.f32 %v108, %v706
    %v739 = vsub.f32 %v109, %v707
    %v740 = vsub.f32 %v110, %v708
    %v741 = vsub.f32 %v111, %v709
    %v742 = vsub.f32 %v112, %v710
    %v743 = vsub.f32 %v113, %v711
    %v744 = vpack.c.bf16 %v713, %v712
    %v745 = vpack.c.bf16 %v715, %v714
    %v746 = vpack.c.bf16 %v717, %v716
    %v747 = vpack.c.bf16 %v719, %v718
    %v748 = vpack.c.bf16 %v721, %v720
    %v749 = vpack.c.bf16 %v723, %v722
    %v750 = vpack.c.bf16 %v725, %v724
    %v751 = vpack.c.bf16 %v727, %v726
    %v752 = vpack.c.bf16 %v729, %v728
    %v753 = vpack.c.bf16 %v731, %v730
    %v754 = vpack.c.bf16 %v733, %v732
    %v755 = vpack.c.bf16 %v735, %v734
    %v756 = vpack.c.bf16 %v737, %v736
    %v757 = vpack.c.bf16 %v739, %v738
    %v758 = vpack.c.bf16 %v741, %v740
    %v759 = vpack.c.bf16 %v743, %v742
    %vm760 = vmpackc.low %vm633, %vm632
    %vm761 = vmpackc.low %vm635, %vm634
    %vm762 = vmpackc.low %vm637, %vm636
    %vm763 = vmpackc.low %vm639, %vm638
    %vm764 = vmpackc.low %vm641, %vm640
    %vm765 = vmpackc.low %vm643, %vm642
    %vm766 = vmpackc.low %vm645, %vm644
    %vm767 = vmpackc.low %vm647, %vm646
    %vm768 = vmpackc.low %vm649, %vm648
    %vm769 = vmpackc.low %vm651, %vm650
    %vm770 = vmpackc.low %vm653, %vm652
    %vm771 = vmpackc.low %vm655, %vm654
    %vm772 = vmpackc.low %vm657, %vm656
    %vm773 = vmpackc.low %vm659, %vm658
    %vm774 = vmpackc.low %vm661, %vm660
    %vm775 = vmpackc.low %vm663, %vm662
    %v776 = vsel %vm760, %v664, 0
    %v777 = vsel %vm761, %v665, 0
    %v778 = vsel %vm762, %v666, 0
    %v779 = vsel %vm763, %v667, 0
    %v780 = vsel %vm764, %v668, 0
    %v781 = vsel %vm765, %v669, 0
    %v782 = vsel %vm766, %v670, 0
    %v783 = vsel %vm767, %v671, 0
    %v784 = vsel %vm768, %v672, 0
    %v785 = vsel %vm769, %v673, 0
    %v786 = vsel %vm770, %v674, 0
    %v787 = vsel %vm771, %v675, 0
    %v788 = vsel %vm772, %v676, 0
    %v789 = vsel %vm773, %v677, 0
    %v790 = vsel %vm774, %v678, 0
    %v791 = vsel %vm775, %v679, 0
    %v792 = vsel %vm760, %v744, 0
    %v793 = vsel %vm761, %v745, 0
    %v794 = vsel %vm762, %v746, 0
    %v795 = vsel %vm763, %v747, 0
    %v796 = vsel %vm764, %v748, 0
    %v797 = vsel %vm765, %v749, 0
    %v798 = vsel %vm766, %v750, 0
    %v799 = vsel %vm767, %v751, 0
    %v800 = vsel %vm768, %v752, 0
    %v801 = vsel %vm769, %v753, 0
    %v802 = vsel %vm770, %v754, 0
    %v803 = vsel %vm771, %v755, 0
    %v804 = vsel %vm772, %v756, 0
    %v805 = vsel %vm773, %v757, 0
    %v806 = vsel %vm774, %v758, 0
    %v807 = vsel %vm775, %v759, 0
    %v808 = vlaneseq
    %v809 = vshrl.u32 %v808, 7
    %v810 = vadd.s32 %v809, 8
    %v811 = vadd.s32 %v809, 16
    %v812 = vadd.s32 %v809, 24
    %v813 = vadd.s32 %v809, 32
    %v814 = vadd.s32 %v809, 40
    %v815 = vadd.s32 %v809, 48
    %v816 = vadd.s32 %v809, 56
    %v817 = vadd.s32 %v809, 64
    %v818 = vadd.s32 %v809, 72
    %v819 = vadd.s32 %v809, 80
    %v820 = vadd.s32 %v809, 88
    %v821 = vadd.s32 %v809, 96
    %v822 = vadd.s32 %v809, 104
    %v823 = vadd.s32 %v809, 112
    %v824 = vadd.s32 %v809, 120
    %v825 = vshra.s32 %v809, 5
    %v826 = vshra.s32 %v810, 5
    %v827 = vshra.s32 %v811, 5
    %v828 = vshra.s32 %v812, 5
    %v829 = vshra.s32 %v813, 5
    %v830 = vshra.s32 %v814, 5
    %v831 = vshra.s32 %v815, 5
    %v832 = vshra.s32 %v816, 5
    %v833 = vshra.s32 %v817, 5
    %v834 = vshra.s32 %v818, 5
    %v835 = vshra.s32 %v819, 5
    %v836 = vshra.s32 %v820, 5
    %v837 = vshra.s32 %v821, 5
    %v838 = vshra.s32 %v822, 5
    %v839 = vshra.s32 %v823, 5
    %v840 = vshra.s32 %v824, 5
    %vm841 = vcmp.eq.s32.totalorder %v825, %v147
    %vm842 = vcmp.eq.s32.totalorder %v826, %v147
    %vm843 = vcmp.eq.s32.totalorder %v827, %v147
    %vm844 = vcmp.eq.s32.totalorder %v828, %v147
    %vm845 = vcmp.eq.s32.totalorder %v829, %v147
    %vm846 = vcmp.eq.s32.totalorder %v830, %v147
    %vm847 = vcmp.eq.s32.totalorder %v831, %v147
    %vm848 = vcmp.eq.s32.totalorder %v832, %v147
    %vm849 = vcmp.eq.s32.totalorder %v833, %v147
    %vm850 = vcmp.eq.s32.totalorder %v834, %v147
    %vm851 = vcmp.eq.s32.totalorder %v835, %v147
    %vm852 = vcmp.eq.s32.totalorder %v836, %v147
    %vm853 = vcmp.eq.s32.totalorder %v837, %v147
    %vm854 = vcmp.eq.s32.totalorder %v838, %v147
    %vm855 = vcmp.eq.s32.totalorder %v839, %v147
    %vm856 = vcmp.eq.s32.totalorder %v840, %v147
    %v857 = vsel %vm841, 1.0, 0.0
    %v858 = vsel %vm842, 1.0, 0.0
    %v859 = vsel %vm843, 1.0, 0.0
    %v860 = vsel %vm844, 1.0, 0.0
    %v861 = vsel %vm845, 1.0, 0.0
    %v862 = vsel %vm846, 1.0, 0.0
    %v863 = vsel %vm847, 1.0, 0.0
    %v864 = vsel %vm848, 1.0, 0.0
    %v865 = vsel %vm849, 1.0, 0.0
    %v866 = vsel %vm850, 1.0, 0.0
    %v867 = vsel %vm851, 1.0, 0.0
    %v868 = vsel %vm852, 1.0, 0.0
    %v869 = vsel %vm853, 1.0, 0.0
    %v870 = vsel %vm854, 1.0, 0.0
    %v871 = vsel %vm855, 1.0, 0.0
    %v872 = vsel %vm856, 1.0, 0.0
    %v873 = vpack.c.bf16 %v858, %v857
    %v874 = vpack.c.bf16 %v860, %v859
    %v875 = vpack.c.bf16 %v862, %v861
    %v876 = vpack.c.bf16 %v864, %v863
    %v877 = vpack.c.bf16 %v866, %v865
    %v878 = vpack.c.bf16 %v868, %v867
    %v879 = vpack.c.bf16 %v870, %v869
    %v880 = vpack.c.bf16 %v872, %v871
    %881 = vmatprep.subr.bf16.mxu0 0
    %882 = vmatpush1.bf16.msra.mxu0 %v873
    %883 = vmatprep.subr.bf16.mxu0 0
    %884 = vmatpush1.bf16.msra.mxu0 %v874
    %885 = vmatprep.subr.bf16.mxu0 0
    %886 = vmatpush1.bf16.msra.mxu0 %v875
    %887 = vmatprep.subr.bf16.mxu0 0
    %888 = vmatpush1.bf16.msra.mxu0 %v876
    %889 = vmatprep.subr.bf16.mxu0 0
    %890 = vmatpush1.bf16.msra.mxu0 %v877
    %891 = vmatprep.subr.bf16.mxu0 0
    %892 = vmatpush1.bf16.msra.mxu0 %v878
    %893 = vmatprep.subr.bf16.mxu0 0
    %894 = vmatpush1.bf16.msra.mxu0 %v879
    %895 = vmatprep.subr.bf16.mxu0 0
    %896 = vmatpush1.bf16.msra.mxu0 %v880
    %897 = vmatprep.subr.bf16.mxu0 0
    %898 = vmatpush1.bf16.msra.mxu0 0
    %899 = vmatprep.subr.bf16.mxu0 0
    %900 = vmatpush1.bf16.msra.mxu0 0
    %901 = vmatprep.subr.bf16.mxu0 0
    %902 = vmatpush1.bf16.msra.mxu0 0
    %903 = vmatprep.subr.bf16.mxu0 0
    %904 = vmatpush1.bf16.msra.mxu0 0
    %905 = vmatprep.subr.bf16.mxu0 0
    %906 = vmatpush1.bf16.msra.mxu0 0
    %907 = vmatprep.subr.bf16.mxu0 0
    %908 = vmatpush1.bf16.msra.mxu0 0
    %909 = vmatprep.subr.bf16.mxu0 0
    %910 = vmatpush1.bf16.msra.mxu0 0
    %911 = vmatprep.subr.bf16.mxu0 0
    %912 = vmatpush1.bf16.msra.mxu0 0
    %913 = vmatprep.mubr.bf16.mxu0 0
    %914 = vmatmul.mubr.bf16.gmra.mrb[0].mxu0 %v744
    %v915 = vpop.f32.mrb[0].mxu0
    %v916 = vadd.f32 0.0, %v915
    %v917 = vpop.f32.mrb[0].mxu0
    %v918 = vpop.f32.mrb[0].mxu0
    %v919 = vadd.f32 0.0, %v918
    %v920 = vpop.f32.mrb[0].mxu0
    %921 = vmatprep.mubr.bf16.mxu0 0
    %922 = vmatmul.mubr.bf16.gmra.mrb[0].mxu0 %v745
    %v923 = vpop.f32.mrb[0].mxu0
    %v924 = vadd.f32 0.0, %v923
    %v925 = vpop.f32.mrb[0].mxu0
    %v926 = vpop.f32.mrb[0].mxu0
    %v927 = vadd.f32 0.0, %v926
    %v928 = vpop.f32.mrb[0].mxu0
    %929 = vmatprep.mubr.bf16.mxu0 0
    %930 = vmatmul.mubr.bf16.gmra.mrb[0].mxu0 %v746
    %v931 = vpop.f32.mrb[0].mxu0
    %v932 = vadd.f32 0.0, %v931
    %v933 = vpop.f32.mrb[0].mxu0
    %v934 = vpop.f32.mrb[0].mxu0
    %v935 = vadd.f32 0.0, %v934
    %v936 = vpop.f32.mrb[0].mxu0
    %937 = vmatprep.mubr.bf16.mxu0 0
    %938 = vmatmul.mubr.bf16.gmra.mrb[0].mxu0 %v747
    %v939 = vpop.f32.mrb[0].mxu0
    %v940 = vadd.f32 0.0, %v939
    %v941 = vpop.f32.mrb[0].mxu0
    %v942 = vpop.f32.mrb[0].mxu0
    %v943 = vadd.f32 0.0, %v942
    %v944 = vpop.f32.mrb[0].mxu0
    %945 = vmatprep.mubr.bf16.mxu0 0
    %946 = vmatmul.mubr.bf16.gmra.mrb[0].mxu0 %v748
    %v947 = vpop.f32.mrb[0].mxu0
    %v948 = vadd.f32 0.0, %v947
    %v949 = vpop.f32.mrb[0].mxu0
    %v950 = vpop.f32.mrb[0].mxu0
    %v951 = vadd.f32 0.0, %v950
    %v952 = vpop.f32.mrb[0].mxu0
    %953 = vmatprep.mubr.bf16.mxu0 0
    %954 = vmatmul.mubr.bf16.gmra.mrb[0].mxu0 %v749
    %v955 = vpop.f32.mrb[0].mxu0
    %v956 = vadd.f32 0.0, %v955
    %v957 = vpop.f32.mrb[0].mxu0
    %v958 = vpop.f32.mrb[0].mxu0
    %v959 = vadd.f32 0.0, %v958
    %v960 = vpop.f32.mrb[0].mxu0
    %961 = vmatprep.mubr.bf16.mxu0 0
    %962 = vmatmul.mubr.bf16.gmra.mrb[0].mxu0 %v750
    %v963 = vpop.f32.mrb[0].mxu0
    %v964 = vadd.f32 0.0, %v963
    %v965 = vpop.f32.mrb[0].mxu0
    %v966 = vpop.f32.mrb[0].mxu0
    %v967 = vadd.f32 0.0, %v966
    %v968 = vpop.f32.mrb[0].mxu0
    %969 = vmatprep.mubr.bf16.mxu0 0
    %970 = vmatmul.mubr.bf16.gmra.mrb[0].mxu0 %v751
    %v971 = vpop.f32.mrb[0].mxu0
    %v972 = vadd.f32 0.0, %v971
    %v973 = vpop.f32.mrb[0].mxu0
    %v974 = vpop.f32.mrb[0].mxu0
    %v975 = vadd.f32 0.0, %v974
    %v976 = vpop.f32.mrb[0].mxu0
    %977 = vmatprep.mubr.bf16.mxu0 0
    %978 = vmatmul.mubr.bf16.gmra.mrb[0].mxu0 %v752
    %v979 = vpop.f32.mrb[0].mxu0
    %v980 = vadd.f32 0.0, %v979
    %v981 = vpop.f32.mrb[0].mxu0
    %v982 = vpop.f32.mrb[0].mxu0
    %v983 = vadd.f32 0.0, %v982
    %v984 = vpop.f32.mrb[0].mxu0
    %985 = vmatprep.mubr.bf16.mxu0 0
    %986 = vmatmul.mubr.bf16.gmra.mrb[0].mxu0 %v753
    %v987 = vpop.f32.mrb[0].mxu0
    %v988 = vadd.f32 0.0, %v987
    %v989 = vpop.f32.mrb[0].mxu0
    %v990 = vpop.f32.mrb[0].mxu0
    %v991 = vadd.f32 0.0, %v990
    %v992 = vpop.f32.mrb[0].mxu0
    %993 = vmatprep.mubr.bf16.mxu0 0
    %994 = vmatmul.mubr.bf16.gmra.mrb[0].mxu0 %v754
    %v995 = vpop.f32.mrb[0].mxu0
    %v996 = vadd.f32 0.0, %v995
    %v997 = vpop.f32.mrb[0].mxu0
    %v998 = vpop.f32.mrb[0].mxu0
    %v999 = vadd.f32 0.0, %v998
    %v1000 = vpop.f32.mrb[0].mxu0
    %1001 = vmatprep.mubr.bf16.mxu0 0
    %1002 = vmatmul.mubr.bf16.gmra.mrb[0].mxu0 %v755
    %v1003 = vpop.f32.mrb[0].mxu0
    %v1004 = vadd.f32 0.0, %v1003
    %v1005 = vpop.f32.mrb[0].mxu0
    %v1006 = vpop.f32.mrb[0].mxu0
    %v1007 = vadd.f32 0.0, %v1006
    %v1008 = vpop.f32.mrb[0].mxu0
    %1009 = vmatprep.mubr.bf16.mxu0 0
    %1010 = vmatmul.mubr.bf16.gmra.mrb[0].mxu0 %v756
    %v1011 = vpop.f32.mrb[0].mxu0
    %v1012 = vadd.f32 0.0, %v1011
    %v1013 = vpop.f32.mrb[0].mxu0
    %v1014 = vpop.f32.mrb[0].mxu0
    %v1015 = vadd.f32 0.0, %v1014
    %v1016 = vpop.f32.mrb[0].mxu0
    %1017 = vmatprep.mubr.bf16.mxu0 0
    %1018 = vmatmul.mubr.bf16.gmra.mrb[0].mxu0 %v757
    %v1019 = vpop.f32.mrb[0].mxu0
    %v1020 = vadd.f32 0.0, %v1019
    %v1021 = vpop.f32.mrb[0].mxu0
    %v1022 = vpop.f32.mrb[0].mxu0
    %v1023 = vadd.f32 0.0, %v1022
    %v1024 = vpop.f32.mrb[0].mxu0
    %1025 = vmatprep.mubr.bf16.mxu0 0
    %1026 = vmatmul.mubr.bf16.gmra.mrb[0].mxu0 %v758
    %v1027 = vpop.f32.mrb[0].mxu0
    %v1028 = vadd.f32 0.0, %v1027
    %v1029 = vpop.f32.mrb[0].mxu0
    %v1030 = vpop.f32.mrb[0].mxu0
    %v1031 = vadd.f32 0.0, %v1030
    %v1032 = vpop.f32.mrb[0].mxu0
    %1033 = vmatprep.mubr.bf16.mxu0 0
    %1034 = vmatmul.mubr.bf16.gmra.mrb[0].mxu0 %v759
    %v1035 = vpop.f32.mrb[0].mxu0
    %v1036 = vadd.f32 0.0, %v1035
    %v1037 = vpop.f32.mrb[0].mxu0
    %v1038 = vpop.f32.mrb[0].mxu0
    %v1039 = vadd.f32 0.0, %v1038
    %v1040 = vpop.f32.mrb[0].mxu0
    %1041 = vdwg.mxu0
    %1042 = vmatprep.subr.bf16.mxu0 0
    %1043 = vmatpush1.bf16.msra.mxu0 %v873
    %1044 = vmatprep.subr.bf16.mxu0 0
    %1045 = vmatpush1.bf16.msra.mxu0 %v874
    %1046 = vmatprep.subr.bf16.mxu0 0
    %1047 = vmatpush1.bf16.msra.mxu0 %v875
    %1048 = vmatprep.subr.bf16.mxu0 0
    %1049 = vmatpush1.bf16.msra.mxu0 %v876
    %1050 = vmatprep.subr.bf16.mxu0 0
    %1051 = vmatpush1.bf16.msra.mxu0 %v877
    %1052 = vmatprep.subr.bf16.mxu0 0
    %1053 = vmatpush1.bf16.msra.mxu0 %v878
    %1054 = vmatprep.subr.bf16.mxu0 0
    %1055 = vmatpush1.bf16.msra.mxu0 %v879
    %1056 = vmatprep.subr.bf16.mxu0 0
    %1057 = vmatpush1.bf16.msra.mxu0 %v880
    %1058 = vmatprep.subr.bf16.mxu0 0
    %1059 = vmatpush1.bf16.msra.mxu0 0
    %1060 = vmatprep.subr.bf16.mxu0 0
    %1061 = vmatpush1.bf16.msra.mxu0 0
    %1062 = vmatprep.subr.bf16.mxu0 0
    %1063 = vmatpush1.bf16.msra.mxu0 0
    %1064 = vmatprep.subr.bf16.mxu0 0
    %1065 = vmatpush1.bf16.msra.mxu0 0
    %1066 = vmatprep.subr.bf16.mxu0 0
    %1067 = vmatpush1.bf16.msra.mxu0 0
    %1068 = vmatprep.subr.bf16.mxu0 0
    %1069 = vmatpush1.bf16.msra.mxu0 0
    %1070 = vmatprep.subr.bf16.mxu0 0
    %1071 = vmatpush1.bf16.msra.mxu0 0
    %1072 = vmatprep.subr.bf16.mxu0 0
    %1073 = vmatpush1.bf16.msra.mxu0 0
    %1074 = vmatprep.mubr.bf16.mxu0 0
    %1075 = vmatmul.mubr.bf16.gmra.mrb[0].mxu0 %v664
    %v1076 = vpop.f32.mrb[0].mxu0
    %v1077 = vadd.f32 %v916, %v1076
    %v1078 = vpop.f32.mrb[0].mxu0
    %v1079 = vpop.f32.mrb[0].mxu0
    %v1080 = vadd.f32 %v919, %v1079
    %v1081 = vpop.f32.mrb[0].mxu0
    %1082 = vmatprep.mubr.bf16.mxu0 0
    %1083 = vmatmul.mubr.bf16.gmra.mrb[0].mxu0 %v665
    %v1084 = vpop.f32.mrb[0].mxu0
    %v1085 = vadd.f32 %v924, %v1084
    %v1086 = vpop.f32.mrb[0].mxu0
    %v1087 = vpop.f32.mrb[0].mxu0
    %v1088 = vadd.f32 %v927, %v1087
    %v1089 = vpop.f32.mrb[0].mxu0
    %1090 = vmatprep.mubr.bf16.mxu0 0
    %1091 = vmatmul.mubr.bf16.gmra.mrb[0].mxu0 %v666
    %v1092 = vpop.f32.mrb[0].mxu0
    %v1093 = vadd.f32 %v932, %v1092
    %v1094 = vpop.f32.mrb[0].mxu0
    %v1095 = vpop.f32.mrb[0].mxu0
    %v1096 = vadd.f32 %v935, %v1095
    %v1097 = vpop.f32.mrb[0].mxu0
    %1098 = vmatprep.mubr.bf16.mxu0 0
    %1099 = vmatmul.mubr.bf16.gmra.mrb[0].mxu0 %v667
    %v1100 = vpop.f32.mrb[0].mxu0
    %v1101 = vadd.f32 %v940, %v1100
    %v1102 = vpop.f32.mrb[0].mxu0
    %v1103 = vpop.f32.mrb[0].mxu0
    %v1104 = vadd.f32 %v943, %v1103
    %v1105 = vpop.f32.mrb[0].mxu0
    %1106 = vmatprep.mubr.bf16.mxu0 0
    %1107 = vmatmul.mubr.bf16.gmra.mrb[0].mxu0 %v668
    %v1108 = vpop.f32.mrb[0].mxu0
    %v1109 = vadd.f32 %v948, %v1108
    %v1110 = vpop.f32.mrb[0].mxu0
    %v1111 = vpop.f32.mrb[0].mxu0
    %v1112 = vadd.f32 %v951, %v1111
    %v1113 = vpop.f32.mrb[0].mxu0
    %1114 = vmatprep.mubr.bf16.mxu0 0
    %1115 = vmatmul.mubr.bf16.gmra.mrb[0].mxu0 %v669
    %v1116 = vpop.f32.mrb[0].mxu0
    %v1117 = vadd.f32 %v956, %v1116
    %v1118 = vpop.f32.mrb[0].mxu0
    %v1119 = vpop.f32.mrb[0].mxu0
    %v1120 = vadd.f32 %v959, %v1119
    %v1121 = vpop.f32.mrb[0].mxu0
    %1122 = vmatprep.mubr.bf16.mxu0 0
    %1123 = vmatmul.mubr.bf16.gmra.mrb[0].mxu0 %v670
    %v1124 = vpop.f32.mrb[0].mxu0
    %v1125 = vadd.f32 %v964, %v1124
    %v1126 = vpop.f32.mrb[0].mxu0
    %v1127 = vpop.f32.mrb[0].mxu0
    %v1128 = vadd.f32 %v967, %v1127
    %v1129 = vpop.f32.mrb[0].mxu0
    %1130 = vmatprep.mubr.bf16.mxu0 0
    %1131 = vmatmul.mubr.bf16.gmra.mrb[0].mxu0 %v671
    %v1132 = vpop.f32.mrb[0].mxu0
    %v1133 = vadd.f32 %v972, %v1132
    %v1134 = vpop.f32.mrb[0].mxu0
    %v1135 = vpop.f32.mrb[0].mxu0
    %v1136 = vadd.f32 %v975, %v1135
    %v1137 = vpop.f32.mrb[0].mxu0
    %1138 = vmatprep.mubr.bf16.mxu0 0
    %1139 = vmatmul.mubr.bf16.gmra.mrb[0].mxu0 %v672
    %v1140 = vpop.f32.mrb[0].mxu0
    %v1141 = vadd.f32 %v980, %v1140
    %v1142 = vpop.f32.mrb[0].mxu0
    %v1143 = vpop.f32.mrb[0].mxu0
    %v1144 = vadd.f32 %v983, %v1143
    %v1145 = vpop.f32.mrb[0].mxu0
    %1146 = vmatprep.mubr.bf16.mxu0 0
    %1147 = vmatmul.mubr.bf16.gmra.mrb[0].mxu0 %v673
    %v1148 = vpop.f32.mrb[0].mxu0
    %v1149 = vadd.f32 %v988, %v1148
    %v1150 = vpop.f32.mrb[0].mxu0
    %v1151 = vpop.f32.mrb[0].mxu0
    %v1152 = vadd.f32 %v991, %v1151
    %v1153 = vpop.f32.mrb[0].mxu0
    %1154 = vmatprep.mubr.bf16.mxu0 0
    %1155 = vmatmul.mubr.bf16.gmra.mrb[0].mxu0 %v674
    %v1156 = vpop.f32.mrb[0].mxu0
    %v1157 = vadd.f32 %v996, %v1156
    %v1158 = vpop.f32.mrb[0].mxu0
    %v1159 = vpop.f32.mrb[0].mxu0
    %v1160 = vadd.f32 %v999, %v1159
    %v1161 = vpop.f32.mrb[0].mxu0
    %1162 = vmatprep.mubr.bf16.mxu0 0
    %1163 = vmatmul.mubr.bf16.gmra.mrb[0].mxu0 %v675
    %v1164 = vpop.f32.mrb[0].mxu0
    %v1165 = vadd.f32 %v1004, %v1164
    %v1166 = vpop.f32.mrb[0].mxu0
    %v1167 = vpop.f32.mrb[0].mxu0
    %v1168 = vadd.f32 %v1007, %v1167
    %v1169 = vpop.f32.mrb[0].mxu0
    %1170 = vmatprep.mubr.bf16.mxu0 0
    %1171 = vmatmul.mubr.bf16.gmra.mrb[0].mxu0 %v676
    %v1172 = vpop.f32.mrb[0].mxu0
    %v1173 = vadd.f32 %v1012, %v1172
    %v1174 = vpop.f32.mrb[0].mxu0
    %v1175 = vpop.f32.mrb[0].mxu0
    %v1176 = vadd.f32 %v1015, %v1175
    %v1177 = vpop.f32.mrb[0].mxu0
    %1178 = vmatprep.mubr.bf16.mxu0 0
    %1179 = vmatmul.mubr.bf16.gmra.mrb[0].mxu0 %v677
    %v1180 = vpop.f32.mrb[0].mxu0
    %v1181 = vadd.f32 %v1020, %v1180
    %v1182 = vpop.f32.mrb[0].mxu0
    %v1183 = vpop.f32.mrb[0].mxu0
    %v1184 = vadd.f32 %v1023, %v1183
    %v1185 = vpop.f32.mrb[0].mxu0
    %1186 = vmatprep.mubr.bf16.mxu0 0
    %1187 = vmatmul.mubr.bf16.gmra.mrb[0].mxu0 %v678
    %v1188 = vpop.f32.mrb[0].mxu0
    %v1189 = vadd.f32 %v1028, %v1188
    %v1190 = vpop.f32.mrb[0].mxu0
    %v1191 = vpop.f32.mrb[0].mxu0
    %v1192 = vadd.f32 %v1031, %v1191
    %v1193 = vpop.f32.mrb[0].mxu0
    %1194 = vmatprep.mubr.bf16.mxu0 0
    %1195 = vmatmul.mubr.bf16.gmra.mrb[0].mxu0 %v679
    %v1196 = vpop.f32.mrb[0].mxu0
    %v1197 = vadd.f32 %v1036, %v1196
    %v1198 = vpop.f32.mrb[0].mxu0
    %v1199 = vpop.f32.mrb[0].mxu0
    %v1200 = vadd.f32 %v1039, %v1199
    %v1201 = vpop.f32.mrb[0].mxu0
    %1202 = vdwg.mxu0
    %1203 = vmatprep.subr.bf16.mxu0 0
    %1204 = vmatpush1.bf16.msra.mxu0 %v873
    %1205 = vmatprep.subr.bf16.mxu0 0
    %1206 = vmatpush1.bf16.msra.mxu0 %v874
    %1207 = vmatprep.subr.bf16.mxu0 0
    %1208 = vmatpush1.bf16.msra.mxu0 %v875
    %1209 = vmatprep.subr.bf16.mxu0 0
    %1210 = vmatpush1.bf16.msra.mxu0 %v876
    %1211 = vmatprep.subr.bf16.mxu0 0
    %1212 = vmatpush1.bf16.msra.mxu0 %v877
    %1213 = vmatprep.subr.bf16.mxu0 0
    %1214 = vmatpush1.bf16.msra.mxu0 %v878
    %1215 = vmatprep.subr.bf16.mxu0 0
    %1216 = vmatpush1.bf16.msra.mxu0 %v879
    %1217 = vmatprep.subr.bf16.mxu0 0
    %1218 = vmatpush1.bf16.msra.mxu0 %v880
    %1219 = vmatprep.subr.bf16.mxu0 0
    %1220 = vmatpush1.bf16.msra.mxu0 0
    %1221 = vmatprep.subr.bf16.mxu0 0
    %1222 = vmatpush1.bf16.msra.mxu0 0
    %1223 = vmatprep.subr.bf16.mxu0 0
    %1224 = vmatpush1.bf16.msra.mxu0 0
    %1225 = vmatprep.subr.bf16.mxu0 0
    %1226 = vmatpush1.bf16.msra.mxu0 0
    %1227 = vmatprep.subr.bf16.mxu0 0
    %1228 = vmatpush1.bf16.msra.mxu0 0
    %1229 = vmatprep.subr.bf16.mxu0 0
    %1230 = vmatpush1.bf16.msra.mxu0 0
    %1231 = vmatprep.subr.bf16.mxu0 0
    %1232 = vmatpush1.bf16.msra.mxu0 0
    %1233 = vmatprep.subr.bf16.mxu0 0
    %1234 = vmatpush1.bf16.msra.mxu0 0
    %1235 = vmatprep.mubr.bf16.mxu0 0
    %1236 = vmatmul.mubr.bf16.gmra.mrb[0].mxu0 %v792
    %v1237 = vpop.f32.mrb[0].mxu0
    %v1238 = vadd.f32 0.0, %v1237
    %v1239 = vpop.f32.mrb[0].mxu0
    %v1240 = vpop.f32.mrb[0].mxu0
    %v1241 = vadd.f32 0.0, %v1240
    %v1242 = vpop.f32.mrb[0].mxu0
    %1243 = vmatprep.mubr.bf16.mxu0 0
    %1244 = vmatmul.mubr.bf16.gmra.mrb[0].mxu0 %v793
    %v1245 = vpop.f32.mrb[0].mxu0
    %v1246 = vadd.f32 0.0, %v1245
    %v1247 = vpop.f32.mrb[0].mxu0
    %v1248 = vpop.f32.mrb[0].mxu0
    %v1249 = vadd.f32 0.0, %v1248
    %v1250 = vpop.f32.mrb[0].mxu0
    %1251 = vmatprep.mubr.bf16.mxu0 0
    %1252 = vmatmul.mubr.bf16.gmra.mrb[0].mxu0 %v794
    %v1253 = vpop.f32.mrb[0].mxu0
    %v1254 = vadd.f32 0.0, %v1253
    %v1255 = vpop.f32.mrb[0].mxu0
    %v1256 = vpop.f32.mrb[0].mxu0
    %v1257 = vadd.f32 0.0, %v1256
    %v1258 = vpop.f32.mrb[0].mxu0
    %1259 = vmatprep.mubr.bf16.mxu0 0
    %1260 = vmatmul.mubr.bf16.gmra.mrb[0].mxu0 %v795
    %v1261 = vpop.f32.mrb[0].mxu0
    %v1262 = vadd.f32 0.0, %v1261
    %v1263 = vpop.f32.mrb[0].mxu0
    %v1264 = vpop.f32.mrb[0].mxu0
    %v1265 = vadd.f32 0.0, %v1264
    %v1266 = vpop.f32.mrb[0].mxu0
    %1267 = vmatprep.mubr.bf16.mxu0 0
    %1268 = vmatmul.mubr.bf16.gmra.mrb[0].mxu0 %v796
    %v1269 = vpop.f32.mrb[0].mxu0
    %v1270 = vadd.f32 0.0, %v1269
    %v1271 = vpop.f32.mrb[0].mxu0
    %v1272 = vpop.f32.mrb[0].mxu0
    %v1273 = vadd.f32 0.0, %v1272
    %v1274 = vpop.f32.mrb[0].mxu0
    %1275 = vmatprep.mubr.bf16.mxu0 0
    %1276 = vmatmul.mubr.bf16.gmra.mrb[0].mxu0 %v797
    %v1277 = vpop.f32.mrb[0].mxu0
    %v1278 = vadd.f32 0.0, %v1277
    %v1279 = vpop.f32.mrb[0].mxu0
    %v1280 = vpop.f32.mrb[0].mxu0
    %v1281 = vadd.f32 0.0, %v1280
    %v1282 = vpop.f32.mrb[0].mxu0
    %1283 = vmatprep.mubr.bf16.mxu0 0
    %1284 = vmatmul.mubr.bf16.gmra.mrb[0].mxu0 %v798
    %v1285 = vpop.f32.mrb[0].mxu0
    %v1286 = vadd.f32 0.0, %v1285
    %v1287 = vpop.f32.mrb[0].mxu0
    %v1288 = vpop.f32.mrb[0].mxu0
    %v1289 = vadd.f32 0.0, %v1288
    %v1290 = vpop.f32.mrb[0].mxu0
    %1291 = vmatprep.mubr.bf16.mxu0 0
    %1292 = vmatmul.mubr.bf16.gmra.mrb[0].mxu0 %v799
    %v1293 = vpop.f32.mrb[0].mxu0
    %v1294 = vadd.f32 0.0, %v1293
    %v1295 = vpop.f32.mrb[0].mxu0
    %v1296 = vpop.f32.mrb[0].mxu0
    %v1297 = vadd.f32 0.0, %v1296
    %v1298 = vpop.f32.mrb[0].mxu0
    %1299 = vmatprep.mubr.bf16.mxu0 0
    %1300 = vmatmul.mubr.bf16.gmra.mrb[0].mxu0 %v800
    %v1301 = vpop.f32.mrb[0].mxu0
    %v1302 = vadd.f32 0.0, %v1301
    %v1303 = vpop.f32.mrb[0].mxu0
    %v1304 = vpop.f32.mrb[0].mxu0
    %v1305 = vadd.f32 0.0, %v1304
    %v1306 = vpop.f32.mrb[0].mxu0
    %1307 = vmatprep.mubr.bf16.mxu0 0
    %1308 = vmatmul.mubr.bf16.gmra.mrb[0].mxu0 %v801
    %v1309 = vpop.f32.mrb[0].mxu0
    %v1310 = vadd.f32 0.0, %v1309
    %v1311 = vpop.f32.mrb[0].mxu0
    %v1312 = vpop.f32.mrb[0].mxu0
    %v1313 = vadd.f32 0.0, %v1312
    %v1314 = vpop.f32.mrb[0].mxu0
    %1315 = vmatprep.mubr.bf16.mxu0 0
    %1316 = vmatmul.mubr.bf16.gmra.mrb[0].mxu0 %v802
    %v1317 = vpop.f32.mrb[0].mxu0
    %v1318 = vadd.f32 0.0, %v1317
    %v1319 = vpop.f32.mrb[0].mxu0
    %v1320 = vpop.f32.mrb[0].mxu0
    %v1321 = vadd.f32 0.0, %v1320
    %v1322 = vpop.f32.mrb[0].mxu0
    %1323 = vmatprep.mubr.bf16.mxu0 0
    %1324 = vmatmul.mubr.bf16.gmra.mrb[0].mxu0 %v803
    %v1325 = vpop.f32.mrb[0].mxu0
    %v1326 = vadd.f32 0.0, %v1325
    %v1327 = vpop.f32.mrb[0].mxu0
    %v1328 = vpop.f32.mrb[0].mxu0
    %v1329 = vadd.f32 0.0, %v1328
    %v1330 = vpop.f32.mrb[0].mxu0
    %1331 = vmatprep.mubr.bf16.mxu0 0
    %1332 = vmatmul.mubr.bf16.gmra.mrb[0].mxu0 %v804
    %v1333 = vpop.f32.mrb[0].mxu0
    %v1334 = vadd.f32 0.0, %v1333
    %v1335 = vpop.f32.mrb[0].mxu0
    %v1336 = vpop.f32.mrb[0].mxu0
    %v1337 = vadd.f32 0.0, %v1336
    %v1338 = vpop.f32.mrb[0].mxu0
    %1339 = vmatprep.mubr.bf16.mxu0 0
    %1340 = vmatmul.mubr.bf16.gmra.mrb[0].mxu0 %v805
    %v1341 = vpop.f32.mrb[0].mxu0
    %v1342 = vadd.f32 0.0, %v1341
    %v1343 = vpop.f32.mrb[0].mxu0
    %v1344 = vpop.f32.mrb[0].mxu0
    %v1345 = vadd.f32 0.0, %v1344
    %v1346 = vpop.f32.mrb[0].mxu0
    %1347 = vmatprep.mubr.bf16.mxu0 0
    %1348 = vmatmul.mubr.bf16.gmra.mrb[0].mxu0 %v806
    %v1349 = vpop.f32.mrb[0].mxu0
    %v1350 = vadd.f32 0.0, %v1349
    %v1351 = vpop.f32.mrb[0].mxu0
    %v1352 = vpop.f32.mrb[0].mxu0
    %v1353 = vadd.f32 0.0, %v1352
    %v1354 = vpop.f32.mrb[0].mxu0
    %1355 = vmatprep.mubr.bf16.mxu0 0
    %1356 = vmatmul.mubr.bf16.gmra.mrb[0].mxu0 %v807
    %v1357 = vpop.f32.mrb[0].mxu0
    %v1358 = vadd.f32 0.0, %v1357
    %v1359 = vpop.f32.mrb[0].mxu0
    %v1360 = vpop.f32.mrb[0].mxu0
    %v1361 = vadd.f32 0.0, %v1360
    %v1362 = vpop.f32.mrb[0].mxu0
    %1363 = vdwg.mxu0
    %1364 = vmatprep.subr.bf16.mxu0 0
    %1365 = vmatpush1.bf16.msra.mxu0 %v873
    %1366 = vmatprep.subr.bf16.mxu0 0
    %1367 = vmatpush1.bf16.msra.mxu0 %v874
    %1368 = vmatprep.subr.bf16.mxu0 0
    %1369 = vmatpush1.bf16.msra.mxu0 %v875
    %1370 = vmatprep.subr.bf16.mxu0 0
    %1371 = vmatpush1.bf16.msra.mxu0 %v876
    %1372 = vmatprep.subr.bf16.mxu0 0
    %1373 = vmatpush1.bf16.msra.mxu0 %v877
    %1374 = vmatprep.subr.bf16.mxu0 0
    %1375 = vmatpush1.bf16.msra.mxu0 %v878
    %1376 = vmatprep.subr.bf16.mxu0 0
    %1377 = vmatpush1.bf16.msra.mxu0 %v879
    %1378 = vmatprep.subr.bf16.mxu0 0
    %1379 = vmatpush1.bf16.msra.mxu0 %v880
    %1380 = vmatprep.subr.bf16.mxu0 0
    %1381 = vmatpush1.bf16.msra.mxu0 0
    %1382 = vmatprep.subr.bf16.mxu0 0
    %1383 = vmatpush1.bf16.msra.mxu0 0
    %1384 = vmatprep.subr.bf16.mxu0 0
    %1385 = vmatpush1.bf16.msra.mxu0 0
    %1386 = vmatprep.subr.bf16.mxu0 0
    %1387 = vmatpush1.bf16.msra.mxu0 0
    %1388 = vmatprep.subr.bf16.mxu0 0
    %1389 = vmatpush1.bf16.msra.mxu0 0
    %1390 = vmatprep.subr.bf16.mxu0 0
    %1391 = vmatpush1.bf16.msra.mxu0 0
    %1392 = vmatprep.subr.bf16.mxu0 0
    %1393 = vmatpush1.bf16.msra.mxu0 0
    %1394 = vmatprep.subr.bf16.mxu0 0
    %1395 = vmatpush1.bf16.msra.mxu0 0
    %1396 = vmatprep.mubr.bf16.mxu0 0
    %1397 = vmatmul.mubr.bf16.gmra.mrb[0].mxu0 %v776
    %v1398 = vpop.f32.mrb[0].mxu0
    %v1399 = vadd.f32 %v1238, %v1398
    %v1400 = vpop.f32.mrb[0].mxu0
    %v1401 = vpop.f32.mrb[0].mxu0
    %v1402 = vadd.f32 %v1241, %v1401
    %v1403 = vpop.f32.mrb[0].mxu0
    %1404 = vmatprep.mubr.bf16.mxu0 0
    %1405 = vmatmul.mubr.bf16.gmra.mrb[0].mxu0 %v777
    %v1406 = vpop.f32.mrb[0].mxu0
    %v1407 = vadd.f32 %v1246, %v1406
    %v1408 = vpop.f32.mrb[0].mxu0
    %v1409 = vpop.f32.mrb[0].mxu0
    %v1410 = vadd.f32 %v1249, %v1409
    %v1411 = vpop.f32.mrb[0].mxu0
    %1412 = vmatprep.mubr.bf16.mxu0 0
    %1413 = vmatmul.mubr.bf16.gmra.mrb[0].mxu0 %v778
    %v1414 = vpop.f32.mrb[0].mxu0
    %v1415 = vadd.f32 %v1254, %v1414
    %v1416 = vpop.f32.mrb[0].mxu0
    %v1417 = vpop.f32.mrb[0].mxu0
    %v1418 = vadd.f32 %v1257, %v1417
    %v1419 = vpop.f32.mrb[0].mxu0
    %1420 = vmatprep.mubr.bf16.mxu0 0
    %1421 = vmatmul.mubr.bf16.gmra.mrb[0].mxu0 %v779
    %v1422 = vpop.f32.mrb[0].mxu0
    %v1423 = vadd.f32 %v1262, %v1422
    %v1424 = vpop.f32.mrb[0].mxu0
    %v1425 = vpop.f32.mrb[0].mxu0
    %v1426 = vadd.f32 %v1265, %v1425
    %v1427 = vpop.f32.mrb[0].mxu0
    %1428 = vmatprep.mubr.bf16.mxu0 0
    %1429 = vmatmul.mubr.bf16.gmra.mrb[0].mxu0 %v780
    %v1430 = vpop.f32.mrb[0].mxu0
    %v1431 = vadd.f32 %v1270, %v1430
    %v1432 = vpop.f32.mrb[0].mxu0
    %v1433 = vpop.f32.mrb[0].mxu0
    %v1434 = vadd.f32 %v1273, %v1433
    %v1435 = vpop.f32.mrb[0].mxu0
    %1436 = vmatprep.mubr.bf16.mxu0 0
    %1437 = vmatmul.mubr.bf16.gmra.mrb[0].mxu0 %v781
    %v1438 = vpop.f32.mrb[0].mxu0
    %v1439 = vadd.f32 %v1278, %v1438
    %v1440 = vpop.f32.mrb[0].mxu0
    %v1441 = vpop.f32.mrb[0].mxu0
    %v1442 = vadd.f32 %v1281, %v1441
    %v1443 = vpop.f32.mrb[0].mxu0
    %1444 = vmatprep.mubr.bf16.mxu0 0
    %1445 = vmatmul.mubr.bf16.gmra.mrb[0].mxu0 %v782
    %v1446 = vpop.f32.mrb[0].mxu0
    %v1447 = vadd.f32 %v1286, %v1446
    %v1448 = vpop.f32.mrb[0].mxu0
    %v1449 = vpop.f32.mrb[0].mxu0
    %v1450 = vadd.f32 %v1289, %v1449
    %v1451 = vpop.f32.mrb[0].mxu0
    %1452 = vmatprep.mubr.bf16.mxu0 0
    %1453 = vmatmul.mubr.bf16.gmra.mrb[0].mxu0 %v783
    %v1454 = vpop.f32.mrb[0].mxu0
    %v1455 = vadd.f32 %v1294, %v1454
    %v1456 = vpop.f32.mrb[0].mxu0
    %v1457 = vpop.f32.mrb[0].mxu0
    %v1458 = vadd.f32 %v1297, %v1457
    %v1459 = vpop.f32.mrb[0].mxu0
    %1460 = vmatprep.mubr.bf16.mxu0 0
    %1461 = vmatmul.mubr.bf16.gmra.mrb[0].mxu0 %v784
    %v1462 = vpop.f32.mrb[0].mxu0
    %v1463 = vadd.f32 %v1302, %v1462
    %v1464 = vpop.f32.mrb[0].mxu0
    %v1465 = vpop.f32.mrb[0].mxu0
    %v1466 = vadd.f32 %v1305, %v1465
    %v1467 = vpop.f32.mrb[0].mxu0
    %1468 = vmatprep.mubr.bf16.mxu0 0
    %1469 = vmatmul.mubr.bf16.gmra.mrb[0].mxu0 %v785
    %v1470 = vpop.f32.mrb[0].mxu0
    %v1471 = vadd.f32 %v1310, %v1470
    %v1472 = vpop.f32.mrb[0].mxu0
    %v1473 = vpop.f32.mrb[0].mxu0
    %v1474 = vadd.f32 %v1313, %v1473
    %v1475 = vpop.f32.mrb[0].mxu0
    %1476 = vmatprep.mubr.bf16.mxu0 0
    %1477 = vmatmul.mubr.bf16.gmra.mrb[0].mxu0 %v786
    %v1478 = vpop.f32.mrb[0].mxu0
    %v1479 = vadd.f32 %v1318, %v1478
    %v1480 = vpop.f32.mrb[0].mxu0
    %v1481 = vpop.f32.mrb[0].mxu0
    %v1482 = vadd.f32 %v1321, %v1481
    %v1483 = vpop.f32.mrb[0].mxu0
    %1484 = vmatprep.mubr.bf16.mxu0 0
    %1485 = vmatmul.mubr.bf16.gmra.mrb[0].mxu0 %v787
    %v1486 = vpop.f32.mrb[0].mxu0
    %v1487 = vadd.f32 %v1326, %v1486
    %v1488 = vpop.f32.mrb[0].mxu0
    %v1489 = vpop.f32.mrb[0].mxu0
    %v1490 = vadd.f32 %v1329, %v1489
    %v1491 = vpop.f32.mrb[0].mxu0
    %1492 = vmatprep.mubr.bf16.mxu0 0
    %1493 = vmatmul.mubr.bf16.gmra.mrb[0].mxu0 %v788
    %v1494 = vpop.f32.mrb[0].mxu0
    %v1495 = vadd.f32 %v1334, %v1494
    %v1496 = vpop.f32.mrb[0].mxu0
    %v1497 = vpop.f32.mrb[0].mxu0
    %v1498 = vadd.f32 %v1337, %v1497
    %v1499 = vpop.f32.mrb[0].mxu0
    %1500 = vmatprep.mubr.bf16.mxu0 0
    %1501 = vmatmul.mubr.bf16.gmra.mrb[0].mxu0 %v789
    %v1502 = vpop.f32.mrb[0].mxu0
    %v1503 = vadd.f32 %v1342, %v1502
    %v1504 = vpop.f32.mrb[0].mxu0
    %v1505 = vpop.f32.mrb[0].mxu0
    %v1506 = vadd.f32 %v1345, %v1505
    %v1507 = vpop.f32.mrb[0].mxu0
    %1508 = vmatprep.mubr.bf16.mxu0 0
    %1509 = vmatmul.mubr.bf16.gmra.mrb[0].mxu0 %v790
    %v1510 = vpop.f32.mrb[0].mxu0
    %v1511 = vadd.f32 %v1350, %v1510
    %v1512 = vpop.f32.mrb[0].mxu0
    %v1513 = vpop.f32.mrb[0].mxu0
    %v1514 = vadd.f32 %v1353, %v1513
    %v1515 = vpop.f32.mrb[0].mxu0
    %1516 = vmatprep.mubr.bf16.mxu0 0
    %1517 = vmatmul.mubr.bf16.gmra.mrb[0].mxu0 %v791
    %v1518 = vpop.f32.mrb[0].mxu0
    %v1519 = vadd.f32 %v1358, %v1518
    %v1520 = vpop.f32.mrb[0].mxu0
    %v1521 = vpop.f32.mrb[0].mxu0
    %v1522 = vadd.f32 %v1361, %v1521
    %v1523 = vpop.f32.mrb[0].mxu0
    %1524 = vdwg.mxu0
    %vm1525 = vcmp.ne.s32.totalorder %v114, 4294967295
    %vm1526 = vcmp.ne.s32.totalorder %v115, 4294967295
    %vm1527 = vcmp.ne.s32.totalorder %v116, 4294967295
    %vm1528 = vcmp.ne.s32.totalorder %v117, 4294967295
    %vm1529 = vcmp.ne.s32.totalorder %v118, 4294967295
    %vm1530 = vcmp.ne.s32.totalorder %v119, 4294967295
    %vm1531 = vcmp.ne.s32.totalorder %v120, 4294967295
    %vm1532 = vcmp.ne.s32.totalorder %v121, 4294967295
    %vm1533 = vcmp.ne.s32.totalorder %v122, 4294967295
    %vm1534 = vcmp.ne.s32.totalorder %v123, 4294967295
    %vm1535 = vcmp.ne.s32.totalorder %v124, 4294967295
    %vm1536 = vcmp.ne.s32.totalorder %v125, 4294967295
    %vm1537 = vcmp.ne.s32.totalorder %v126, 4294967295
    %vm1538 = vcmp.ne.s32.totalorder %v127, 4294967295
    %vm1539 = vcmp.ne.s32.totalorder %v128, 4294967295
    %vm1540 = vcmp.ne.s32.totalorder %v129, 4294967295
    %vm1541 = vcmp.ne.s32.totalorder %v130, 4294967295
    %vm1542 = vcmp.ne.s32.totalorder %v131, 4294967295
    %vm1543 = vcmp.ne.s32.totalorder %v132, 4294967295
    %vm1544 = vcmp.ne.s32.totalorder %v133, 4294967295
    %vm1545 = vcmp.ne.s32.totalorder %v134, 4294967295
    %vm1546 = vcmp.ne.s32.totalorder %v135, 4294967295
    %vm1547 = vcmp.ne.s32.totalorder %v136, 4294967295
    %vm1548 = vcmp.ne.s32.totalorder %v137, 4294967295
    %vm1549 = vcmp.ne.s32.totalorder %v138, 4294967295
    %vm1550 = vcmp.ne.s32.totalorder %v139, 4294967295
    %vm1551 = vcmp.ne.s32.totalorder %v140, 4294967295
    %vm1552 = vcmp.ne.s32.totalorder %v141, 4294967295
    %vm1553 = vcmp.ne.s32.totalorder %v142, 4294967295
    %vm1554 = vcmp.ne.s32.totalorder %v143, 4294967295
    %vm1555 = vcmp.ne.s32.totalorder %v144, 4294967295
    %vm1556 = vcmp.ne.s32.totalorder %v145, 4294967295
    %v1557 = vsel %vm1525, %v1077, 1.0
    %v1558 = vsel %vm1526, %v1080, 1.0
    %v1559 = vsel %vm1527, %v1085, 1.0
    %v1560 = vsel %vm1528, %v1088, 1.0
    %v1561 = vsel %vm1529, %v1093, 1.0
    %v1562 = vsel %vm1530, %v1096, 1.0
    %v1563 = vsel %vm1531, %v1101, 1.0
    %v1564 = vsel %vm1532, %v1104, 1.0
    %v1565 = vsel %vm1533, %v1109, 1.0
    %v1566 = vsel %vm1534, %v1112, 1.0
    %v1567 = vsel %vm1535, %v1117, 1.0
    %v1568 = vsel %vm1536, %v1120, 1.0
    %v1569 = vsel %vm1537, %v1125, 1.0
    %v1570 = vsel %vm1538, %v1128, 1.0
    %v1571 = vsel %vm1539, %v1133, 1.0
    %v1572 = vsel %vm1540, %v1136, 1.0
    %v1573 = vsel %vm1541, %v1141, 1.0
    %v1574 = vsel %vm1542, %v1144, 1.0
    %v1575 = vsel %vm1543, %v1149, 1.0
    %v1576 = vsel %vm1544, %v1152, 1.0
    %v1577 = vsel %vm1545, %v1157, 1.0
    %v1578 = vsel %vm1546, %v1160, 1.0
    %v1579 = vsel %vm1547, %v1165, 1.0
    %v1580 = vsel %vm1548, %v1168, 1.0
    %v1581 = vsel %vm1549, %v1173, 1.0
    %v1582 = vsel %vm1550, %v1176, 1.0
    %v1583 = vsel %vm1551, %v1181, 1.0
    %v1584 = vsel %vm1552, %v1184, 1.0
    %v1585 = vsel %vm1553, %v1189, 1.0
    %v1586 = vsel %vm1554, %v1192, 1.0
    %v1587 = vsel %vm1555, %v1197, 1.0
    %v1588 = vsel %vm1556, %v1200, 1.0
    %v1589 = vsel %vm1525, %v1399, 1.0
    %v1590 = vsel %vm1526, %v1402, 1.0
    %v1591 = vsel %vm1527, %v1407, 1.0
    %v1592 = vsel %vm1528, %v1410, 1.0
    %v1593 = vsel %vm1529, %v1415, 1.0
    %v1594 = vsel %vm1530, %v1418, 1.0
    %v1595 = vsel %vm1531, %v1423, 1.0
    %v1596 = vsel %vm1532, %v1426, 1.0
    %v1597 = vsel %vm1533, %v1431, 1.0
    %v1598 = vsel %vm1534, %v1434, 1.0
    %v1599 = vsel %vm1535, %v1439, 1.0
    %v1600 = vsel %vm1536, %v1442, 1.0
    %v1601 = vsel %vm1537, %v1447, 1.0
    %v1602 = vsel %vm1538, %v1450, 1.0
    %v1603 = vsel %vm1539, %v1455, 1.0
    %v1604 = vsel %vm1540, %v1458, 1.0
    %v1605 = vsel %vm1541, %v1463, 1.0
    %v1606 = vsel %vm1542, %v1466, 1.0
    %v1607 = vsel %vm1543, %v1471, 1.0
    %v1608 = vsel %vm1544, %v1474, 1.0
    %v1609 = vsel %vm1545, %v1479, 1.0
    %v1610 = vsel %vm1546, %v1482, 1.0
    %v1611 = vsel %vm1547, %v1487, 1.0
    %v1612 = vsel %vm1548, %v1490, 1.0
    %v1613 = vsel %vm1549, %v1495, 1.0
    %v1614 = vsel %vm1550, %v1498, 1.0
    %v1615 = vsel %vm1551, %v1503, 1.0
    %v1616 = vsel %vm1552, %v1506, 1.0
    %v1617 = vsel %vm1553, %v1511, 1.0
    %v1618 = vsel %vm1554, %v1514, 1.0
    %v1619 = vsel %vm1555, %v1519, 1.0
    %v1620 = vsel %vm1556, %v1522, 1.0
    %v1621 = vrcp.pop %v1589
    %v1622 = vmul.f32 %v1557, %v1621
    %v1623 = vrcp.pop %v1590
    %v1624 = vmul.f32 %v1558, %v1623
    %v1625 = vrcp.pop %v1591
    %v1626 = vmul.f32 %v1559, %v1625
    %v1627 = vrcp.pop %v1592
    %v1628 = vmul.f32 %v1560, %v1627
    %v1629 = vrcp.pop %v1593
    %v1630 = vmul.f32 %v1561, %v1629
    %v1631 = vrcp.pop %v1594
    %v1632 = vmul.f32 %v1562, %v1631
    %v1633 = vrcp.pop %v1595
    %v1634 = vmul.f32 %v1563, %v1633
    %v1635 = vrcp.pop %v1596
    %v1636 = vmul.f32 %v1564, %v1635
    %v1637 = vrcp.pop %v1597
    %v1638 = vmul.f32 %v1565, %v1637
    %v1639 = vrcp.pop %v1598
    %v1640 = vmul.f32 %v1566, %v1639
    %v1641 = vrcp.pop %v1599
    %v1642 = vmul.f32 %v1567, %v1641
    %v1643 = vrcp.pop %v1600
    %v1644 = vmul.f32 %v1568, %v1643
    %v1645 = vrcp.pop %v1601
    %v1646 = vmul.f32 %v1569, %v1645
    %v1647 = vrcp.pop %v1602
    %v1648 = vmul.f32 %v1570, %v1647
    %v1649 = vrcp.pop %v1603
    %v1650 = vmul.f32 %v1571, %v1649
    %v1651 = vrcp.pop %v1604
    %v1652 = vmul.f32 %v1572, %v1651
    %v1653 = vrcp.pop %v1605
    %v1654 = vmul.f32 %v1573, %v1653
    %v1655 = vrcp.pop %v1606
    %v1656 = vmul.f32 %v1574, %v1655
    %v1657 = vrcp.pop %v1607
    %v1658 = vmul.f32 %v1575, %v1657
    %v1659 = vrcp.pop %v1608
    %v1660 = vmul.f32 %v1576, %v1659
    %v1661 = vrcp.pop %v1609
    %v1662 = vmul.f32 %v1577, %v1661
    %v1663 = vrcp.pop %v1610
    %v1664 = vmul.f32 %v1578, %v1663
    %v1665 = vrcp.pop %v1611
    %v1666 = vmul.f32 %v1579, %v1665
    %v1667 = vrcp.pop %v1612
    %v1668 = vmul.f32 %v1580, %v1667
    %v1669 = vrcp.pop %v1613
    %v1670 = vmul.f32 %v1581, %v1669
    %v1671 = vrcp.pop %v1614
    %v1672 = vmul.f32 %v1582, %v1671
    %v1673 = vrcp.pop %v1615
    %v1674 = vmul.f32 %v1583, %v1673
    %v1675 = vrcp.pop %v1616
    %v1676 = vmul.f32 %v1584, %v1675
    %v1677 = vrcp.pop %v1617
    %v1678 = vmul.f32 %v1585, %v1677
    %v1679 = vrcp.pop %v1618
    %v1680 = vmul.f32 %v1586, %v1679
    %v1681 = vrcp.pop %v1619
    %v1682 = vmul.f32 %v1587, %v1681
    %v1683 = vrcp.pop %v1620
    %v1684 = vmul.f32 %v1588, %v1683
    %v1685 = vlog2.pop %v1622
    %v1686 = vmul.f32 %v1685, 0.6931472
    %v1687 = vlog2.pop %v1624
    %v1688 = vmul.f32 %v1687, 0.6931472
    %v1689 = vlog2.pop %v1626
    %v1690 = vmul.f32 %v1689, 0.6931472
    %v1691 = vlog2.pop %v1628
    %v1692 = vmul.f32 %v1691, 0.6931472
    %v1693 = vlog2.pop %v1630
    %v1694 = vmul.f32 %v1693, 0.6931472
    %v1695 = vlog2.pop %v1632
    %v1696 = vmul.f32 %v1695, 0.6931472
    %v1697 = vlog2.pop %v1634
    %v1698 = vmul.f32 %v1697, 0.6931472
    %v1699 = vlog2.pop %v1636
    %v1700 = vmul.f32 %v1699, 0.6931472
    %v1701 = vlog2.pop %v1638
    %v1702 = vmul.f32 %v1701, 0.6931472
    %v1703 = vlog2.pop %v1640
    %v1704 = vmul.f32 %v1703, 0.6931472
    %v1705 = vlog2.pop %v1642
    %v1706 = vmul.f32 %v1705, 0.6931472
    %v1707 = vlog2.pop %v1644
    %v1708 = vmul.f32 %v1707, 0.6931472
    %v1709 = vlog2.pop %v1646
    %v1710 = vmul.f32 %v1709, 0.6931472
    %v1711 = vlog2.pop %v1648
    %v1712 = vmul.f32 %v1711, 0.6931472
    %v1713 = vlog2.pop %v1650
    %v1714 = vmul.f32 %v1713, 0.6931472
    %v1715 = vlog2.pop %v1652
    %v1716 = vmul.f32 %v1715, 0.6931472
    %v1717 = vlog2.pop %v1654
    %v1718 = vmul.f32 %v1717, 0.6931472
    %v1719 = vlog2.pop %v1656
    %v1720 = vmul.f32 %v1719, 0.6931472
    %v1721 = vlog2.pop %v1658
    %v1722 = vmul.f32 %v1721, 0.6931472
    %v1723 = vlog2.pop %v1660
    %v1724 = vmul.f32 %v1723, 0.6931472
    %v1725 = vlog2.pop %v1662
    %v1726 = vmul.f32 %v1725, 0.6931472
    %v1727 = vlog2.pop %v1664
    %v1728 = vmul.f32 %v1727, 0.6931472
    %v1729 = vlog2.pop %v1666
    %v1730 = vmul.f32 %v1729, 0.6931472
    %v1731 = vlog2.pop %v1668
    %v1732 = vmul.f32 %v1731, 0.6931472
    %v1733 = vlog2.pop %v1670
    %v1734 = vmul.f32 %v1733, 0.6931472
    %v1735 = vlog2.pop %v1672
    %v1736 = vmul.f32 %v1735, 0.6931472
    %v1737 = vlog2.pop %v1674
    %v1738 = vmul.f32 %v1737, 0.6931472
    %v1739 = vlog2.pop %v1676
    %v1740 = vmul.f32 %v1739, 0.6931472
    %v1741 = vlog2.pop %v1678
    %v1742 = vmul.f32 %v1741, 0.6931472
    %v1743 = vlog2.pop %v1680
    %v1744 = vmul.f32 %v1743, 0.6931472
    %v1745 = vlog2.pop %v1682
    %v1746 = vmul.f32 %v1745, 0.6931472
    %v1747 = vlog2.pop %v1684
    %v1748 = vmul.f32 %v1747, 0.6931472
    %v1749 = vld [vmem:[#allocation2] sm:$0xff]
    %v1750 = vld [vmem:[#allocation2 + $0x8] sm:$0xff]
    %v1751 = vld [vmem:[#allocation2 + $0x10] sm:$0xff]
    %v1752 = vld [vmem:[#allocation2 + $0x18] sm:$0xff]
    %v1753 = vld [vmem:[#allocation2 + $0x20] sm:$0xff]
    %v1754 = vld [vmem:[#allocation2 + $0x28] sm:$0xff]
    %v1755 = vld [vmem:[#allocation2 + $0x30] sm:$0xff]
    %v1756 = vld [vmem:[#allocation2 + $0x38] sm:$0xff]
    %v1757 = vld [vmem:[#allocation2 + $0x40] sm:$0xff]
    %v1758 = vld [vmem:[#allocation2 + $0x48] sm:$0xff]
    %v1759 = vld [vmem:[#allocation2 + $0x50] sm:$0xff]
    %v1760 = vld [vmem:[#allocation2 + $0x58] sm:$0xff]
    %v1761 = vld [vmem:[#allocation2 + $0x60] sm:$0xff]
    %v1762 = vld [vmem:[#allocation2 + $0x68] sm:$0xff]
    %v1763 = vld [vmem:[#allocation2 + $0x70] sm:$0xff]
    %v1764 = vld [vmem:[#allocation2 + $0x78] sm:$0xff]
    %v1765 = vld [vmem:[#allocation2 + $0x80] sm:$0xff]
    %v1766 = vld [vmem:[#allocation2 + $0x88] sm:$0xff]
    %v1767 = vld [vmem:[#allocation2 + $0x90] sm:$0xff]
    %v1768 = vld [vmem:[#allocation2 + $0x98] sm:$0xff]
    %v1769 = vld [vmem:[#allocation2 + $0xa0] sm:$0xff]
    %v1770 = vld [vmem:[#allocation2 + $0xa8] sm:$0xff]
    %v1771 = vld [vmem:[#allocation2 + $0xb0] sm:$0xff]
    %v1772 = vld [vmem:[#allocation2 + $0xb8] sm:$0xff]
    %v1773 = vld [vmem:[#allocation2 + $0xc0] sm:$0xff]
    %v1774 = vld [vmem:[#allocation2 + $0xc8] sm:$0xff]
    %v1775 = vld [vmem:[#allocation2 + $0xd0] sm:$0xff]
    %v1776 = vld [vmem:[#allocation2 + $0xd8] sm:$0xff]
    %v1777 = vld [vmem:[#allocation2 + $0xe0] sm:$0xff]
    %v1778 = vld [vmem:[#allocation2 + $0xe8] sm:$0xff]
    %v1779 = vld [vmem:[#allocation2 + $0xf0] sm:$0xff]
    %v1780 = vld [vmem:[#allocation2 + $0xf8] sm:$0xff]
    %v1781 = vadd.f32 %v1749, %v1686
    %v1782 = vadd.f32 %v1750, %v1688
    %v1783 = vadd.f32 %v1751, %v1690
    %v1784 = vadd.f32 %v1752, %v1692
    %v1785 = vadd.f32 %v1753, %v1694
    %v1786 = vadd.f32 %v1754, %v1696
    %v1787 = vadd.f32 %v1755, %v1698
    %v1788 = vadd.f32 %v1756, %v1700
    %v1789 = vadd.f32 %v1757, %v1702
    %v1790 = vadd.f32 %v1758, %v1704
    %v1791 = vadd.f32 %v1759, %v1706
    %v1792 = vadd.f32 %v1760, %v1708
    %v1793 = vadd.f32 %v1761, %v1710
    %v1794 = vadd.f32 %v1762, %v1712
    %v1795 = vadd.f32 %v1763, %v1714
    %v1796 = vadd.f32 %v1764, %v1716
    %v1797 = vadd.f32 %v1765, %v1718
    %v1798 = vadd.f32 %v1766, %v1720
    %v1799 = vadd.f32 %v1767, %v1722
    %v1800 = vadd.f32 %v1768, %v1724
    %v1801 = vadd.f32 %v1769, %v1726
    %v1802 = vadd.f32 %v1770, %v1728
    %v1803 = vadd.f32 %v1771, %v1730
    %v1804 = vadd.f32 %v1772, %v1732
    %v1805 = vadd.f32 %v1773, %v1734
    %v1806 = vadd.f32 %v1774, %v1736
    %v1807 = vadd.f32 %v1775, %v1738
    %v1808 = vadd.f32 %v1776, %v1740
    %v1809 = vadd.f32 %v1777, %v1742
    %v1810 = vadd.f32 %v1778, %v1744
    %v1811 = vadd.f32 %v1779, %v1746
    %v1812 = vadd.f32 %v1780, %v1748
    %vm1813 = vcmask 31744
    %1814 = vst.msk [vmem:[#allocation2] sm:$0xff] %vm1813, %v1781
    %1815 = vst.msk [vmem:[#allocation2 + $0x8] sm:$0xff] %vm1813, %v1782
    %1816 = vst.msk [vmem:[#allocation2 + $0x10] sm:$0xff] %vm1813, %v1783
    %1817 = vst.msk [vmem:[#allocation2 + $0x18] sm:$0xff] %vm1813, %v1784
    %1818 = vst.msk [vmem:[#allocation2 + $0x20] sm:$0xff] %vm1813, %v1785
    %1819 = vst.msk [vmem:[#allocation2 + $0x28] sm:$0xff] %vm1813, %v1786
    %1820 = vst.msk [vmem:[#allocation2 + $0x30] sm:$0xff] %vm1813, %v1787
    %1821 = vst.msk [vmem:[#allocation2 + $0x38] sm:$0xff] %vm1813, %v1788
    %1822 = vst.msk [vmem:[#allocation2 + $0x40] sm:$0xff] %vm1813, %v1789
    %1823 = vst.msk [vmem:[#allocation2 + $0x48] sm:$0xff] %vm1813, %v1790
    %1824 = vst.msk [vmem:[#allocation2 + $0x50] sm:$0xff] %vm1813, %v1791
    %1825 = vst.msk [vmem:[#allocation2 + $0x58] sm:$0xff] %vm1813, %v1792
    %1826 = vst.msk [vmem:[#allocation2 + $0x60] sm:$0xff] %vm1813, %v1793
    %1827 = vst.msk [vmem:[#allocation2 + $0x68] sm:$0xff] %vm1813, %v1794
    %1828 = vst.msk [vmem:[#allocation2 + $0x70] sm:$0xff] %vm1813, %v1795
    %1829 = vst.msk [vmem:[#allocation2 + $0x78] sm:$0xff] %vm1813, %v1796
    %1830 = vst.msk [vmem:[#allocation2 + $0x80] sm:$0xff] %vm1813, %v1797
    %1831 = vst.msk [vmem:[#allocation2 + $0x88] sm:$0xff] %vm1813, %v1798
    %1832 = vst.msk [vmem:[#allocation2 + $0x90] sm:$0xff] %vm1813, %v1799
    %1833 = vst.msk [vmem:[#allocation2 + $0x98] sm:$0xff] %vm1813, %v1800
    %1834 = vst.msk [vmem:[#allocation2 + $0xa0] sm:$0xff] %vm1813, %v1801
    %1835 = vst.msk [vmem:[#allocation2 + $0xa8] sm:$0xff] %vm1813, %v1802
    %1836 = vst.msk [vmem:[#allocation2 + $0xb0] sm:$0xff] %vm1813, %v1803
    %1837 = vst.msk [vmem:[#allocation2 + $0xb8] sm:$0xff] %vm1813, %v1804
    %1838 = vst.msk [vmem:[#allocation2 + $0xc0] sm:$0xff] %vm1813, %v1805
    %1839 = vst.msk [vmem:[#allocation2 + $0xc8] sm:$0xff] %vm1813, %v1806
    %1840 = vst.msk [vmem:[#allocation2 + $0xd0] sm:$0xff] %vm1813, %v1807
    %1841 = vst.msk [vmem:[#allocation2 + $0xd8] sm:$0xff] %vm1813, %v1808
    %1842 = vst.msk [vmem:[#allocation2 + $0xe0] sm:$0xff] %vm1813, %v1809
    %1843 = vst.msk [vmem:[#allocation2 + $0xe8] sm:$0xff] %vm1813, %v1810
    %1844 = vst.msk [vmem:[#allocation2 + $0xf0] sm:$0xff] %vm1813, %v1811
    %1845 = vst.msk [vmem:[#allocation2 + $0xf8] sm:$0xff] %vm1813, %v1812
    %v1846 = vld [vmem:[#allocation3] sm:$0xff]
    %v1847 = vld [vmem:[#allocation3 + $0x8] sm:$0xff]
    %v1848 = vld [vmem:[#allocation3 + $0x10] sm:$0xff]
    %v1849 = vld [vmem:[#allocation3 + $0x18] sm:$0xff]
    %v1850 = vld [vmem:[#allocation3 + $0x20] sm:$0xff]
    %v1851 = vld [vmem:[#allocation3 + $0x28] sm:$0xff]
    %v1852 = vld [vmem:[#allocation3 + $0x30] sm:$0xff]
    %v1853 = vld [vmem:[#allocation3 + $0x38] sm:$0xff]
    %v1854 = vld [vmem:[#allocation3 + $0x40] sm:$0xff]
    %v1855 = vld [vmem:[#allocation3 + $0x48] sm:$0xff]
    %v1856 = vld [vmem:[#allocation3 + $0x50] sm:$0xff]
    %v1857 = vld [vmem:[#allocation3 + $0x58] sm:$0xff]
    %v1858 = vld [vmem:[#allocation3 + $0x60] sm:$0xff]
    %v1859 = vld [vmem:[#allocation3 + $0x68] sm:$0xff]
    %v1860 = vld [vmem:[#allocation3 + $0x70] sm:$0xff]
    %v1861 = vld [vmem:[#allocation3 + $0x78] sm:$0xff]
    %v1862 = vld [vmem:[#allocation3 + $0x80] sm:$0xff]
    %v1863 = vld [vmem:[#allocation3 + $0x88] sm:$0xff]
    %v1864 = vld [vmem:[#allocation3 + $0x90] sm:$0xff]
    %v1865 = vld [vmem:[#allocation3 + $0x98] sm:$0xff]
    %v1866 = vld [vmem:[#allocation3 + $0xa0] sm:$0xff]
    %v1867 = vld [vmem:[#allocation3 + $0xa8] sm:$0xff]
    %v1868 = vld [vmem:[#allocation3 + $0xb0] sm:$0xff]
    %v1869 = vld [vmem:[#allocation3 + $0xb8] sm:$0xff]
    %v1870 = vld [vmem:[#allocation3 + $0xc0] sm:$0xff]
    %v1871 = vld [vmem:[#allocation3 + $0xc8] sm:$0xff]
    %v1872 = vld [vmem:[#allocation3 + $0xd0] sm:$0xff]
    %v1873 = vld [vmem:[#allocation3 + $0xd8] sm:$0xff]
    %v1874 = vld [vmem:[#allocation3 + $0xe0] sm:$0xff]
    %v1875 = vld [vmem:[#allocation3 + $0xe8] sm:$0xff]
    %v1876 = vld [vmem:[#allocation3 + $0xf0] sm:$0xff]
    %v1877 = vld [vmem:[#allocation3 + $0xf8] sm:$0xff]
    %v1878 = vsel %vm1525, 1, 0
    %v1879 = vsel %vm1526, 1, 0
    %v1880 = vsel %vm1527, 1, 0
    %v1881 = vsel %vm1528, 1, 0
    %v1882 = vsel %vm1529, 1, 0
    %v1883 = vsel %vm1530, 1, 0
    %v1884 = vsel %vm1531, 1, 0
    %v1885 = vsel %vm1532, 1, 0
    %v1886 = vsel %vm1533, 1, 0
    %v1887 = vsel %vm1534, 1, 0
    %v1888 = vsel %vm1535, 1, 0
    %v1889 = vsel %vm1536, 1, 0
    %v1890 = vsel %vm1537, 1, 0
    %v1891 = vsel %vm1538, 1, 0
    %v1892 = vsel %vm1539, 1, 0
    %v1893 = vsel %vm1540, 1, 0
    %v1894 = vsel %vm1541, 1, 0
    %v1895 = vsel %vm1542, 1, 0
    %v1896 = vsel %vm1543, 1, 0
    %v1897 = vsel %vm1544, 1, 0
    %v1898 = vsel %vm1545, 1, 0
    %v1899 = vsel %vm1546, 1, 0
    %v1900 = vsel %vm1547, 1, 0
    %v1901 = vsel %vm1548, 1, 0
    %v1902 = vsel %vm1549, 1, 0
    %v1903 = vsel %vm1550, 1, 0
    %v1904 = vsel %vm1551, 1, 0
    %v1905 = vsel %vm1552, 1, 0
    %v1906 = vsel %vm1553, 1, 0
    %v1907 = vsel %vm1554, 1, 0
    %v1908 = vsel %vm1555, 1, 0
    %v1909 = vsel %vm1556, 1, 0
    %v1910 = vcvt.s32.f32 %v1878
    %v1911 = vcvt.s32.f32 %v1879
    %v1912 = vcvt.s32.f32 %v1880
    %v1913 = vcvt.s32.f32 %v1881
    %v1914 = vcvt.s32.f32 %v1882
    %v1915 = vcvt.s32.f32 %v1883
    %v1916 = vcvt.s32.f32 %v1884
    %v1917 = vcvt.s32.f32 %v1885
    %v1918 = vcvt.s32.f32 %v1886
    %v1919 = vcvt.s32.f32 %v1887
    %v1920 = vcvt.s32.f32 %v1888
    %v1921 = vcvt.s32.f32 %v1889
    %v1922 = vcvt.s32.f32 %v1890
    %v1923 = vcvt.s32.f32 %v1891
    %v1924 = vcvt.s32.f32 %v1892
    %v1925 = vcvt.s32.f32 %v1893
    %v1926 = vcvt.s32.f32 %v1894
    %v1927 = vcvt.s32.f32 %v1895
    %v1928 = vcvt.s32.f32 %v1896
    %v1929 = vcvt.s32.f32 %v1897
    %v1930 = vcvt.s32.f32 %v1898
    %v1931 = vcvt.s32.f32 %v1899
    %v1932 = vcvt.s32.f32 %v1900
    %v1933 = vcvt.s32.f32 %v1901
    %v1934 = vcvt.s32.f32 %v1902
    %v1935 = vcvt.s32.f32 %v1903
    %v1936 = vcvt.s32.f32 %v1904
    %v1937 = vcvt.s32.f32 %v1905
    %v1938 = vcvt.s32.f32 %v1906
    %v1939 = vcvt.s32.f32 %v1907
    %v1940 = vcvt.s32.f32 %v1908
    %v1941 = vcvt.s32.f32 %v1909
    %v1942 = vadd.f32 %v1846, %v1910
    %v1943 = vadd.f32 %v1847, %v1911
    %v1944 = vadd.f32 %v1848, %v1912
    %v1945 = vadd.f32 %v1849, %v1913
    %v1946 = vadd.f32 %v1850, %v1914
    %v1947 = vadd.f32 %v1851, %v1915
    %v1948 = vadd.f32 %v1852, %v1916
    %v1949 = vadd.f32 %v1853, %v1917
    %v1950 = vadd.f32 %v1854, %v1918
    %v1951 = vadd.f32 %v1855, %v1919
    %v1952 = vadd.f32 %v1856, %v1920
    %v1953 = vadd.f32 %v1857, %v1921
    %v1954 = vadd.f32 %v1858, %v1922
    %v1955 = vadd.f32 %v1859, %v1923
    %v1956 = vadd.f32 %v1860, %v1924
    %v1957 = vadd.f32 %v1861, %v1925
    %v1958 = vadd.f32 %v1862, %v1926
    %v1959 = vadd.f32 %v1863, %v1927
    %v1960 = vadd.f32 %v1864, %v1928
    %v1961 = vadd.f32 %v1865, %v1929
    %v1962 = vadd.f32 %v1866, %v1930
    %v1963 = vadd.f32 %v1867, %v1931
    %v1964 = vadd.f32 %v1868, %v1932
    %v1965 = vadd.f32 %v1869, %v1933
    %v1966 = vadd.f32 %v1870, %v1934
    %v1967 = vadd.f32 %v1871, %v1935
    %v1968 = vadd.f32 %v1872, %v1936
    %v1969 = vadd.f32 %v1873, %v1937
    %v1970 = vadd.f32 %v1874, %v1938
    %v1971 = vadd.f32 %v1875, %v1939
    %v1972 = vadd.f32 %v1876, %v1940
    %v1973 = vadd.f32 %v1877, %v1941
    %1974 = vst.msk [vmem:[#allocation3] sm:$0xff] %vm1813, %v1942
    %1975 = vst.msk [vmem:[#allocation3 + $0x8] sm:$0xff] %vm1813, %v1943
    %1976 = vst.msk [vmem:[#allocation3 + $0x10] sm:$0xff] %vm1813, %v1944
    %1977 = vst.msk [vmem:[#allocation3 + $0x18] sm:$0xff] %vm1813, %v1945
    %1978 = vst.msk [vmem:[#allocation3 + $0x20] sm:$0xff] %vm1813, %v1946
    %1979 = vst.msk [vmem:[#allocation3 + $0x28] sm:$0xff] %vm1813, %v1947
    %1980 = vst.msk [vmem:[#allocation3 + $0x30] sm:$0xff] %vm1813, %v1948
    %1981 = vst.msk [vmem:[#allocation3 + $0x38] sm:$0xff] %vm1813, %v1949
    %1982 = vst.msk [vmem:[#allocation3 + $0x40] sm:$0xff] %vm1813, %v1950
    %1983 = vst.msk [vmem:[#allocation3 + $0x48] sm:$0xff] %vm1813, %v1951
    %1984 = vst.msk [vmem:[#allocation3 + $0x50] sm:$0xff] %vm1813, %v1952
    %1985 = vst.msk [vmem:[#allocation3 + $0x58] sm:$0xff] %vm1813, %v1953
    %1986 = vst.msk [vmem:[#allocation3 + $0x60] sm:$0xff] %vm1813, %v1954
    %1987 = vst.msk [vmem:[#allocation3 + $0x68] sm:$0xff] %vm1813, %v1955
    %1988 = vst.msk [vmem:[#allocation3 + $0x70] sm:$0xff] %vm1813, %v1956
    %1989 = vst.msk [vmem:[#allocation3 + $0x78] sm:$0xff] %vm1813, %v1957
    %1990 = vst.msk [vmem:[#allocation3 + $0x80] sm:$0xff] %vm1813, %v1958
    %1991 = vst.msk [vmem:[#allocation3 + $0x88] sm:$0xff] %vm1813, %v1959
    %1992 = vst.msk [vmem:[#allocation3 + $0x90] sm:$0xff] %vm1813, %v1960
    %1993 = vst.msk [vmem:[#allocation3 + $0x98] sm:$0xff] %vm1813, %v1961
    %1994 = vst.msk [vmem:[#allocation3 + $0xa0] sm:$0xff] %vm1813, %v1962
    %1995 = vst.msk [vmem:[#allocation3 + $0xa8] sm:$0xff] %vm1813, %v1963
    %1996 = vst.msk [vmem:[#allocation3 + $0xb0] sm:$0xff] %vm1813, %v1964
    %1997 = vst.msk [vmem:[#allocation3 + $0xb8] sm:$0xff] %vm1813, %v1965
    %1998 = vst.msk [vmem:[#allocation3 + $0xc0] sm:$0xff] %vm1813, %v1966
    %1999 = vst.msk [vmem:[#allocation3 + $0xc8] sm:$0xff] %vm1813, %v1967
    %2000 = vst.msk [vmem:[#allocation3 + $0xd0] sm:$0xff] %vm1813, %v1968
    %2001 = vst.msk [vmem:[#allocation3 + $0xd8] sm:$0xff] %vm1813, %v1969
    %2002 = vst.msk [vmem:[#allocation3 + $0xe0] sm:$0xff] %vm1813, %v1970
    %2003 = vst.msk [vmem:[#allocation3 + $0xe8] sm:$0xff] %vm1813, %v1971
    %2004 = vst.msk [vmem:[#allocation3 + $0xf0] sm:$0xff] %vm1813, %v1972
    %2005 = vst.msk [vmem:[#allocation3 + $0xf8] sm:$0xff] %vm1813, %v1973
    // Predicated region
    $region14: #{tpu_custom_call.1} parent=1 // pred_check
      %p2006 = pneg %p13
    $region15: #{tpu_custom_call.1} parent=1 // pred_check_branch
      %2008 = sbr.rel (%p2006) target = $region17
    $region16: #{tpu_custom_call.1} parent=1 // pred_region
      %v2009 = vld [vmem:[#allocation2] sm:$0xff]
      %v2010 = vld [vmem:[#allocation2 + $0x8] sm:$0xff]
      %v2011 = vld [vmem:[#allocation2 + $0x10] sm:$0xff]
      %v2012 = vld [vmem:[#allocation2 + $0x18] sm:$0xff]
      %v2013 = vld [vmem:[#allocation2 + $0x20] sm:$0xff]
      %v2014 = vld [vmem:[#allocation2 + $0x28] sm:$0xff]
      %v2015 = vld [vmem:[#allocation2 + $0x30] sm:$0xff]
      %v2016 = vld [vmem:[#allocation2 + $0x38] sm:$0xff]
      %v2017 = vld [vmem:[#allocation2 + $0x40] sm:$0xff]
      %v2018 = vld [vmem:[#allocation2 + $0x48] sm:$0xff]
      %v2019 = vld [vmem:[#allocation2 + $0x50] sm:$0xff]
      %v2020 = vld [vmem:[#allocation2 + $0x58] sm:$0xff]
      %v2021 = vld [vmem:[#allocation2 + $0x60] sm:$0xff]
      %v2022 = vld [vmem:[#allocation2 + $0x68] sm:$0xff]
      %v2023 = vld [vmem:[#allocation2 + $0x70] sm:$0xff]
      %v2024 = vld [vmem:[#allocation2 + $0x78] sm:$0xff]
      %v2025 = vld [vmem:[#allocation2 + $0x80] sm:$0xff]
      %v2026 = vld [vmem:[#allocation2 + $0x88] sm:$0xff]
      %v2027 = vld [vmem:[#allocation2 + $0x90] sm:$0xff]
      %v2028 = vld [vmem:[#allocation2 + $0x98] sm:$0xff]
      %v2029 = vld [vmem:[#allocation2 + $0xa0] sm:$0xff]
      %v2030 = vld [vmem:[#allocation2 + $0xa8] sm:$0xff]
      %v2031 = vld [vmem:[#allocation2 + $0xb0] sm:$0xff]
      %v2032 = vld [vmem:[#allocation2 + $0xb8] sm:$0xff]
      %v2033 = vld [vmem:[#allocation2 + $0xc0] sm:$0xff]
      %v2034 = vld [vmem:[#allocation2 + $0xc8] sm:$0xff]
      %v2035 = vld [vmem:[#allocation2 + $0xd0] sm:$0xff]
      %v2036 = vld [vmem:[#allocation2 + $0xd8] sm:$0xff]
      %v2037 = vld [vmem:[#allocation2 + $0xe0] sm:$0xff]
      %v2038 = vld [vmem:[#allocation2 + $0xe8] sm:$0xff]
      %v2039 = vld [vmem:[#allocation2 + $0xf0] sm:$0xff]
      %v2040 = vld [vmem:[#allocation2 + $0xf8] sm:$0xff]
      %v2041 = vsel %vm1813, %v2009, 0.0
      %v2042 = vsel %vm1813, %v2010, 0.0
      %v2043 = vadd.f32 %v2041, %v2042
      %v2044 = vsel %vm1813, %v2011, 0.0
      %v2045 = vadd.f32 %v2043, %v2044
      %v2046 = vsel %vm1813, %v2012, 0.0
      %v2047 = vadd.f32 %v2045, %v2046
      %v2048 = vsel %vm1813, %v2013, 0.0
      %v2049 = vadd.f32 %v2047, %v2048
      %v2050 = vsel %vm1813, %v2014, 0.0
      %v2051 = vadd.f32 %v2049, %v2050
      %v2052 = vsel %vm1813, %v2015, 0.0
      %v2053 = vadd.f32 %v2051, %v2052
      %v2054 = vsel %vm1813, %v2016, 0.0
      %v2055 = vadd.f32 %v2053, %v2054
      %v2056 = vsel %vm1813, %v2017, 0.0
      %v2057 = vadd.f32 %v2055, %v2056
      %v2058 = vsel %vm1813, %v2018, 0.0
      %v2059 = vadd.f32 %v2057, %v2058
      %v2060 = vsel %vm1813, %v2019, 0.0
      %v2061 = vadd.f32 %v2059, %v2060
      %v2062 = vsel %vm1813, %v2020, 0.0
      %v2063 = vadd.f32 %v2061, %v2062
      %v2064 = vsel %vm1813, %v2021, 0.0
      %v2065 = vadd.f32 %v2063, %v2064
      %v2066 = vsel %vm1813, %v2022, 0.0
      %v2067 = vadd.f32 %v2065, %v2066
      %v2068 = vsel %vm1813, %v2023, 0.0
      %v2069 = vadd.f32 %v2067, %v2068
      %v2070 = vsel %vm1813, %v2024, 0.0
      %v2071 = vadd.f32 %v2069, %v2070
      %v2072 = vsel %vm1813, %v2025, 0.0
      %v2073 = vadd.f32 %v2071, %v2072
      %v2074 = vsel %vm1813, %v2026, 0.0
      %v2075 = vadd.f32 %v2073, %v2074
      %v2076 = vsel %vm1813, %v2027, 0.0
      %v2077 = vadd.f32 %v2075, %v2076
      %v2078 = vsel %vm1813, %v2028, 0.0
      %v2079 = vadd.f32 %v2077, %v2078
      %v2080 = vsel %vm1813, %v2029, 0.0
      %v2081 = vadd.f32 %v2079, %v2080
      %v2082 = vsel %vm1813, %v2030, 0.0
      %v2083 = vadd.f32 %v2081, %v2082
      %v2084 = vsel %vm1813, %v2031, 0.0
      %v2085 = vadd.f32 %v2083, %v2084
      %v2086 = vsel %vm1813, %v2032, 0.0
      %v2087 = vadd.f32 %v2085, %v2086
      %v2088 = vsel %vm1813, %v2033, 0.0
      %v2089 = vadd.f32 %v2087, %v2088
      %v2090 = vsel %vm1813, %v2034, 0.0
      %v2091 = vadd.f32 %v2089, %v2090
      %v2092 = vsel %vm1813, %v2035, 0.0
      %v2093 = vadd.f32 %v2091, %v2092
      %v2094 = vsel %vm1813, %v2036, 0.0
      %v2095 = vadd.f32 %v2093, %v2094
      %v2096 = vsel %vm1813, %v2037, 0.0
      %v2097 = vadd.f32 %v2095, %v2096
      %v2098 = vsel %vm1813, %v2038, 0.0
      %v2099 = vadd.f32 %v2097, %v2098
      %v2100 = vsel %vm1813, %v2039, 0.0
      %v2101 = vadd.f32 %v2099, %v2100
      %v2102 = vsel %vm1813, %v2040, 0.0
      %v2103 = vadd.f32 %v2101, %v2102
      %2104 = vadd.xlane.f32.xlu0 %v2103
      %v2105 = vpop.xlane.xlu0 %2104
      %v2106 = vrot.slane %v2105, 4
      %v2107 = vadd.f32 %v2105, %v2106
      %v2108 = vrot.slane %v2107, 2
      %v2109 = vadd.f32 %v2107, %v2108
      %v2110 = vrot.slane %v2109, 1
      %v2111 = vadd.f32 %v2109, %v2110
      %s2112 = vtos %v2111
      %v2113 = vstv %s2112
      %v2114 = vld [vmem:[#allocation3] sm:$0xff]
      %v2115 = vld [vmem:[#allocation3 + $0x8] sm:$0xff]
      %v2116 = vld [vmem:[#allocation3 + $0x10] sm:$0xff]
      %v2117 = vld [vmem:[#allocation3 + $0x18] sm:$0xff]
      %v2118 = vld [vmem:[#allocation3 + $0x20] sm:$0xff]
      %v2119 = vld [vmem:[#allocation3 + $0x28] sm:$0xff]
      %v2120 = vld [vmem:[#allocation3 + $0x30] sm:$0xff]
      %v2121 = vld [vmem:[#allocation3 + $0x38] sm:$0xff]
      %v2122 = vld [vmem:[#allocation3 + $0x40] sm:$0xff]
      %v2123 = vld [vmem:[#allocation3 + $0x48] sm:$0xff]
      %v2124 = vld [vmem:[#allocation3 + $0x50] sm:$0xff]
      %v2125 = vld [vmem:[#allocation3 + $0x58] sm:$0xff]
      %v2126 = vld [vmem:[#allocation3 + $0x60] sm:$0xff]
      %v2127 = vld [vmem:[#allocation3 + $0x68] sm:$0xff]
      %v2128 = vld [vmem:[#allocation3 + $0x70] sm:$0xff]
      %v2129 = vld [vmem:[#allocation3 + $0x78] sm:$0xff]
      %v2130 = vld [vmem:[#allocation3 + $0x80] sm:$0xff]
      %v2131 = vld [vmem:[#allocation3 + $0x88] sm:$0xff]
      %v2132 = vld [vmem:[#allocation3 + $0x90] sm:$0xff]
      %v2133 = vld [vmem:[#allocation3 + $0x98] sm:$0xff]
      %v2134 = vld [vmem:[#allocation3 + $0xa0] sm:$0xff]
      %v2135 = vld [vmem:[#allocation3 + $0xa8] sm:$0xff]
      %v2136 = vld [vmem:[#allocation3 + $0xb0] sm:$0xff]
      %v2137 = vld [vmem:[#allocation3 + $0xb8] sm:$0xff]
      %v2138 = vld [vmem:[#allocation3 + $0xc0] sm:$0xff]
      %v2139 = vld [vmem:[#allocation3 + $0xc8] sm:$0xff]
      %v2140 = vld [vmem:[#allocation3 + $0xd0] sm:$0xff]
      %v2141 = vld [vmem:[#allocation3 + $0xd8] sm:$0xff]
      %v2142 = vld [vmem:[#allocation3 + $0xe0] sm:$0xff]
      %v2143 = vld [vmem:[#allocation3 + $0xe8] sm:$0xff]
      %v2144 = vld [vmem:[#allocation3 + $0xf0] sm:$0xff]
      %v2145 = vld [vmem:[#allocation3 + $0xf8] sm:$0xff]
      %v2146 = vsel %vm1813, %v2114, 0.0
      %v2147 = vsel %vm1813, %v2115, 0.0
      %v2148 = vadd.f32 %v2146, %v2147
      %v2149 = vsel %vm1813, %v2116, 0.0
      %v2150 = vadd.f32 %v2148, %v2149
      %v2151 = vsel %vm1813, %v2117, 0.0
      %v2152 = vadd.f32 %v2150, %v2151
      %v2153 = vsel %vm1813, %v2118, 0.0
      %v2154 = vadd.f32 %v2152, %v2153
      %v2155 = vsel %vm1813, %v2119, 0.0
      %v2156 = vadd.f32 %v2154, %v2155
      %v2157 = vsel %vm1813, %v2120, 0.0
      %v2158 = vadd.f32 %v2156, %v2157
      %v2159 = vsel %vm1813, %v2121, 0.0
      %v2160 = vadd.f32 %v2158, %v2159
      %v2161 = vsel %vm1813, %v2122, 0.0
      %v2162 = vadd.f32 %v2160, %v2161
      %v2163 = vsel %vm1813, %v2123, 0.0
      %v2164 = vadd.f32 %v2162, %v2163
      %v2165 = vsel %vm1813, %v2124, 0.0
      %v2166 = vadd.f32 %v2164, %v2165
      %v2167 = vsel %vm1813, %v2125, 0.0
      %v2168 = vadd.f32 %v2166, %v2167
      %v2169 = vsel %vm1813, %v2126, 0.0
      %v2170 = vadd.f32 %v2168, %v2169
      %v2171 = vsel %vm1813, %v2127, 0.0
      %v2172 = vadd.f32 %v2170, %v2171
      %v2173 = vsel %vm1813, %v2128, 0.0
      %v2174 = vadd.f32 %v2172, %v2173
      %v2175 = vsel %vm1813, %v2129, 0.0
      %v2176 = vadd.f32 %v2174, %v2175
      %v2177 = vsel %vm1813, %v2130, 0.0
      %v2178 = vadd.f32 %v2176, %v2177
      %v2179 = vsel %vm1813, %v2131, 0.0
      %v2180 = vadd.f32 %v2178, %v2179
      %v2181 = vsel %vm1813, %v2132, 0.0
      %v2182 = vadd.f32 %v2180, %v2181
      %v2183 = vsel %vm1813, %v2133, 0.0
      %v2184 = vadd.f32 %v2182, %v2183
      %v2185 = vsel %vm1813, %v2134, 0.0
      %v2186 = vadd.f32 %v2184, %v2185
      %v2187 = vsel %vm1813, %v2135, 0.0
      %v2188 = vadd.f32 %v2186, %v2187
      %v2189 = vsel %vm1813, %v2136, 0.0
      %v2190 = vadd.f32 %v2188, %v2189
      %v2191 = vsel %vm1813, %v2137, 0.0
      %v2192 = vadd.f32 %v2190, %v2191
      %v2193 = vsel %vm1813, %v2138, 0.0
      %v2194 = vadd.f32 %v2192, %v2193
      %v2195 = vsel %vm1813, %v2139, 0.0
      %v2196 = vadd.f32 %v2194, %v2195
      %v2197 = vsel %vm1813, %v2140, 0.0
      %v2198 = vadd.f32 %v2196, %v2197
      %v2199 = vsel %vm1813, %v2141, 0.0
      %v2200 = vadd.f32 %v2198, %v2199
      %v2201 = vsel %vm1813, %v2142, 0.0
      %v2202 = vadd.f32 %v2200, %v2201
      %v2203 = vsel %vm1813, %v2143, 0.0
      %v2204 = vadd.f32 %v2202, %v2203
      %v2205 = vsel %vm1813, %v2144, 0.0
      %v2206 = vadd.f32 %v2204, %v2205
      %v2207 = vsel %vm1813, %v2145, 0.0
      %v2208 = vadd.f32 %v2206, %v2207
      %2209 = vadd.xlane.f32.xlu0 %v2208
      %v2210 = vpop.xlane.xlu0 %2209
      %v2211 = vrot.slane %v2210, 4
      %v2212 = vadd.f32 %v2210, %v2211
      %v2213 = vrot.slane %v2212, 2
      %v2214 = vadd.f32 %v2212, %v2213
      %v2215 = vrot.slane %v2214, 1
      %v2216 = vadd.f32 %v2214, %v2215
      %s2217 = vtos %v2216
      %v2218 = vstv %s2217
      %v2219 = vrcp.pop %v2218
      %v2220 = vmul.f32 %v2113, %v2219
      %vm2221 = vcmask 0
      %2222 = vst.msk [vmem:[#allocation4] sm:$0x1] %vm2221, %v2220
    $region17: #{tpu_custom_call.1} parent=1 // pred_fallthru
      _
    // Predicated region
    $region18: #{tpu_custom_call.1} parent=1 // pred_check
      _
    $region19: #{tpu_custom_call.1} parent=1 // pred_check_branch
      %2224 = sbr.rel (0) target = $region21
    $region20: #{tpu_custom_call.1} parent=1 // pred_region
      %s2226 = ssub.s32 16, 16
      %2227 = vsyncadd [#allocation5], %s2226
      %s2229 = sshll.u32 [#allocation4], 4
      %s2230 = int_to_ptr.vmem [resolvable:$true] %s2229
      %2232 = dma.vmem_to_hbm [thread:$0]  %s2230, 16, %s2, [#allocation5]
    $region21: #{tpu_custom_call.1} parent=1 // pred_fallthru
      _
    // Predicated region
    $region22: #{tpu_custom_call.1} parent=1 // pred_check
      _
    $region23: #{tpu_custom_call.1} parent=1 // pred_check_branch
      %2234 = sbr.rel (0) target = $region25
    $region24: #{tpu_custom_call.1} parent=1 // pred_region
      %2235 = dma.done [#allocation5], 16
    $region25: #{tpu_custom_call.1} parent=1 // pred_fallthru
      _
    %2236 = vsyncpa [#allocation5], 1

</llo_original>
